<compile_context>
chip_gen: v7x
topology: tpu7x:2x2x1
jax: 0.10.0
libtpu: 0.0.40
codegen_flags: <defaults>
</compile_context>

<pallas_src>
import functools

import numpy as np
import jax
import jax.numpy as jnp
from jax.experimental import pallas as pl
from jax.experimental.pallas import tpu as pltpu

# ----------------------------- config (small) -------------------------------
NUM_NODES = 16          # num_nodes
RNN_UNITS = 32          # rnn_units
INPUT_DIM = 4           # feature_dim
MAX_DIFFUSION_STEP = 2  # max_diffusion_step
NUM_RNN_LAYERS = 2      # num_rnn_layers
NUM_SUPPORTS = 1        # filter_type='laplacian' -> single scaled Laplacian
NUM_MATRICES = NUM_SUPPORTS * MAX_DIFFUSION_STEP + 1
BATCH = 2


# ------------------------------ Pallas kernel --------------------------------
def encoder_kernel(*refs, num_layers, num_matrices, rnn_units):
    """Full encoder (all layers, all batch items) in one kernel invocation.

    refs layout:
      x_ref:   (B*N, Din0)        layer-0 input features (batch row-stacked)
      h0_ref:  (L, B*N, U)        initial hidden state per layer
      sup_ref: (B*N, B*N)         block-diagonal scaled-Laplacian support
      then per layer l: wru_ref (K*D_l, 2U), bru_ref (1, 2U),
                        wc_ref  (K*D_l, U),  bc_ref  (1, U)
      hid_ref: (L, B*N, U)        output: new hidden state per layer
    """
    x_ref, h0_ref, sup_ref = refs[0], refs[1], refs[2]
    w_refs = refs[3:3 + 4 * num_layers]
    hid_ref = refs[3 + 4 * num_layers]

    sup = sup_ref[...]          # (BN, BN) f32
    out = x_ref[...]            # (BN, Din) f32 -- layer input, updated per layer
    U = rnn_units

    def cheb_terms(m):
        """Chebyshev terms T_0..T_{K-1} of the diffusion operator applied to m."""
        terms = [m]
        if num_matrices > 1:
            m1 = jnp.dot(sup, m, preferred_element_type=jnp.float32)
            terms.append(m1)
            mkm2, mkm1 = m, m1
            for _ in range(2, num_matrices):
                mk = 2.0 * jnp.dot(sup, mkm1,
                                   preferred_element_type=jnp.float32) - mkm2
                terms.append(mk)
                mkm2, mkm1 = mkm1, mk
        return terms

    for layer in range(num_layers):
        wru_ref, bru_ref, wc_ref, bc_ref = w_refs[4 * layer:4 * (layer + 1)]
        h = h0_ref[layer]       # (BN, U)

        # x-part diffusion is identical in both gconvs of this layer -> do once.
        x_terms = cheb_terms(out)

        def gconv(state, x_terms=x_terms):
            # per-order interleave [T_k(x) | T_k(state)] == T_k([x | state]),
            # lane-concatenated over k so the projection is ONE wide matmul.
            s_terms = cheb_terms(state)
            cols = []
            for xt, st in zip(x_terms, s_terms):
                cols.append(xt)
                cols.append(st)
            return jnp.concatenate(cols, axis=-1)               # (BN, K*D)

        # fused r/u projection: one matmul, 2U-wide output, split on lanes
        th = gconv(h)
        ru = jax.nn.sigmoid(
            jnp.dot(th, wru_ref[...], preferred_element_type=jnp.float32)
            + bru_ref[...])                                     # (BN, 2U)
        r = ru[:, :U]
        u = ru[:, U:]

        tc = gconv(r * h)
        c = jnp.tanh(
            jnp.dot(tc, wc_ref[...], preferred_element_type=jnp.float32)
            + bc_ref[...])                                      # (BN, U)

        h_new = u * h + (1.0 - u) * c
        hid_ref[layer] = h_new
        out = h_new


def encoder_forward(inputs, kparams, support_bd, hidden_state=None):
    """EncoderModel.forward: inputs (B, N*input_dim) ->
    (output (B, N*U), hidden (num_layers, B, N*U))."""
    B = inputs.shape[0]
    N, U, L = NUM_NODES, RNN_UNITS, NUM_RNN_LAYERS
    din = inputs.shape[1] // N
    x = inputs.reshape(B * N, din).astype(jnp.float32)
    if hidden_state is None:
        h0 = jnp.zeros((L, B * N, U), jnp.float32)
    else:
        h0 = hidden_state.reshape(L, B * N, U).astype(jnp.float32)

    flat_w = []
    for p in kparams:
        flat_w.extend(p)
    n_in = 3 + len(flat_w)

    kernel = functools.partial(encoder_kernel, num_layers=L,
                               num_matrices=NUM_MATRICES, rnn_units=U)
    hid = pl.pallas_call(
        kernel,
        out_shape=jax.ShapeDtypeStruct((L, B * N, U), jnp.float32),
        in_specs=[pl.BlockSpec(memory_space=pltpu.MemorySpace.VMEM)] * n_in,
        out_specs=pl.BlockSpec(memory_space=pltpu.MemorySpace.VMEM),
    )(x, h0, support_bd, *flat_w)

    hid = hid.reshape(L, B, N * U)
    return hid[-1], hid


# --------------------------- params & support glue ---------------------------
def scaled_laplacian(adj):
    """filter_type='laplacian': 2 L / lambda_max - I, L = I - D^-1/2 W D^-1/2."""
    adj = np.maximum(adj, adj.T)
    d = adj.sum(axis=1)
    with np.errstate(divide="ignore"):
        d_inv_sqrt = np.where(d > 0, d ** -0.5, 0.0)
    n = adj.shape[0]
    lap = np.eye(n) - d_inv_sqrt[:, None] * adj * d_inv_sqrt[None, :]
    lam_max = np.linalg.eigvalsh(lap).max()
    return ((2.0 / lam_max) * lap - np.eye(n)).astype(np.float32)


def init_params(key):
    """Deterministic synthetic params.  Flat layout matches the PyTorch
    LayerParams (get_weights((D*K, out)), bias_start 1.0 for r/u, 0.0 for c);
    the kernel consumes a (K*D, out) row-reordered view (row d*K+k -> k*D+d)
    matching the lane-concatenated Chebyshev term layout, with r/u fused."""
    kparams, fparams = [], []
    for layer in range(NUM_RNN_LAYERS):
        din = INPUT_DIM if layer == 0 else RNN_UNITS
        D = din + RNN_UNITS
        key, k1, k2 = jax.random.split(key, 3)
        w_ru = 0.1 * jax.random.normal(
            k1, (D * NUM_MATRICES, 2 * RNN_UNITS), jnp.float32)
        w_c = 0.1 * jax.random.normal(
            k2, (D * NUM_MATRICES, RNN_UNITS), jnp.float32)
        b_ru = jnp.ones((2 * RNN_UNITS,), jnp.float32)   # bias_start = 1.0
        b_c = jnp.zeros((RNN_UNITS,), jnp.float32)       # bias_start = 0.0

        # PyTorch row order is d*K + k; kernel term order is k*D + d.
        wru_k = (w_ru.reshape(D, NUM_MATRICES, 2 * RNN_UNITS)
                 .transpose(1, 0, 2).reshape(NUM_MATRICES * D, 2 * RNN_UNITS))
        wc_k = (w_c.reshape(D, NUM_MATRICES, RNN_UNITS)
                .transpose(1, 0, 2).reshape(NUM_MATRICES * D, RNN_UNITS))

        kparams.append((wru_k, b_ru.reshape(1, -1), wc_k, b_c.reshape(1, -1)))
        fparams.append((w_ru, b_ru, w_c, b_c))
    return kparams, fparams, key


# ------------------------ pure-JAX reference (checks) ------------------------
def gconv_ref(x_flat, state_flat, sup, W, b):
    B = x_flat.shape[0]
    N = NUM_NODES
    xs = jnp.concatenate(
        [x_flat.reshape(B, N, -1), state_flat.reshape(B, N, -1)], axis=2)
    D = xs.shape[2]
    x0 = xs.transpose(1, 2, 0).reshape(N, D * B)
    mats = [x0]
    x1 = sup @ x0
    mats.append(x1)
    xkm2, xkm1 = x0, x1
    for _ in range(2, MAX_DIFFUSION_STEP + 1):
        xk = 2.0 * (sup @ xkm1) - xkm2
        mats.append(xk)
        xkm2, xkm1 = xkm1, xk
    xst = jnp.stack(mats, 0).reshape(NUM_MATRICES, N, D, B).transpose(3, 1, 2, 0)
    xst = xst.reshape(B * N, D * NUM_MATRICES)
    out = xst @ W + b
    return out.reshape(B, N * W.shape[1])


def dcgru_cell_ref(x_flat, h_flat, sup, flat_p):
    w_ru, b_ru, w_c, b_c = flat_p
    U, N, B = RNN_UNITS, NUM_NODES, x_flat.shape[0]
    value = jax.nn.sigmoid(gconv_ref(x_flat, h_flat, sup, w_ru, b_ru))
    value = value.reshape(B, N, 2 * U)
    r = value[..., :U].reshape(B, N * U)
    u = value[..., U:].reshape(B, N * U)
    c = jnp.tanh(gconv_ref(x_flat, r * h_flat, sup, w_c, b_c))
    return u * h_flat + (1.0 - u) * c


def encoder_ref(inputs, fparams, sup):
    B = inputs.shape[0]
    hidden_state = jnp.zeros((NUM_RNN_LAYERS, B, NUM_NODES * RNN_UNITS),
                             jnp.float32)
    hs, output = [], inputs
    for layer_num in range(NUM_RNN_LAYERS):
        output = dcgru_cell_ref(output, hidden_state[layer_num], sup,
                                fparams[layer_num])
        hs.append(output)
    return output, jnp.stack(hs)


# ----------------------------------- main ------------------------------------
if __name__ == "__main__":
    key = jax.random.PRNGKey(0)
    np_rng = np.random.RandomState(0)
    adj = np_rng.rand(NUM_NODES, NUM_NODES).astype(np.float32)
    support = jnp.asarray(scaled_laplacian(adj))
    # block-diagonal support so the whole batch rides the sublane axis
    support_bd = jnp.kron(jnp.eye(BATCH, dtype=jnp.float32), support)

    kparams, fparams, key = init_params(key)
    key, kin = jax.random.split(key)
    inputs = jax.random.normal(kin, (BATCH, NUM_NODES * INPUT_DIM), jnp.float32)

    out, hidden = encoder_forward(inputs, kparams, support_bd)
    out = jax.block_until_ready(out)
    hidden = jax.block_until_ready(hidden)

    assert out.shape == (BATCH, NUM_NODES * RNN_UNITS)
    assert hidden.shape == (NUM_RNN_LAYERS, BATCH, NUM_NODES * RNN_UNITS)

    ref_out, ref_hidden = encoder_ref(inputs, fparams, support)
    np.testing.assert_allclose(np.asarray(out), np.asarray(ref_out),
                               rtol=1e-2, atol=1e-2)
    np.testing.assert_allclose(np.asarray(hidden), np.asarray(ref_hidden),
                               rtol=1e-2, atol=1e-2)
    print("KERNEL_OK")
</pallas_src>

<mosaic_0001>
module attributes {stable_mosaic.version = 11 : i64} {
  func.func @encoder_kernel(%arg0: memref<32x4xf32, #tpu.memory_space<vmem>>, %arg1: memref<2x32x32xf32, #tpu.memory_space<vmem>>, %arg2: memref<32x32xf32, #tpu.memory_space<vmem>>, %arg3: memref<108x64xf32, #tpu.memory_space<vmem>>, %arg4: memref<1x64xf32, #tpu.memory_space<vmem>>, %arg5: memref<108x32xf32, #tpu.memory_space<vmem>>, %arg6: memref<1x32xf32, #tpu.memory_space<vmem>>, %arg7: memref<192x64xf32, #tpu.memory_space<vmem>>, %arg8: memref<1x64xf32, #tpu.memory_space<vmem>>, %arg9: memref<192x32xf32, #tpu.memory_space<vmem>>, %arg10: memref<1x32xf32, #tpu.memory_space<vmem>>, %arg11: memref<2x32x32xf32, #tpu.memory_space<vmem>>) attributes {dimension_semantics = [], scalar_prefetch = 0 : i64, scratch_operands = 0 : i64, tpu.core_type = #tpu.core_type<tc>} {
    %c0 = arith.constant 0 : index
    %c0_0 = arith.constant 0 : index
    %0 = vector.load %arg2[%c0, %c0_0] : memref<32x32xf32, #tpu.memory_space<vmem>>, vector<32x32xf32>
    %c0_1 = arith.constant 0 : index
    %c0_2 = arith.constant 0 : index
    %1 = vector.load %arg0[%c0_1, %c0_2] : memref<32x4xf32, #tpu.memory_space<vmem>>, vector<32x4xf32>
    %c0_3 = arith.constant 0 : index
    %c0_4 = arith.constant 0 : index
    %c0_5 = arith.constant 0 : index
    %2 = vector.load %arg1[%c0_3, %c0_4, %c0_5] : memref<2x32x32xf32, #tpu.memory_space<vmem>>, vector<1x32x32xf32>
    %3 = vector.shape_cast %2 : vector<1x32x32xf32> to vector<32x32xf32>
    %cst = arith.constant dense<0.000000e+00> : vector<32x4xf32>
    %4 = tpu.matmul %0, %1, %cst {dimension_numbers = #tpu.dot_dimension_numbers<[1], [0], [0], [1], [0, 0, 1, 1], [], []>} : vector<32x32xf32>, vector<32x4xf32>, vector<32x4xf32> -> vector<32x4xf32>
    %cst_6 = arith.constant dense<0.000000e+00> : vector<32x4xf32>
    %5 = tpu.matmul %0, %4, %cst_6 {dimension_numbers = #tpu.dot_dimension_numbers<[1], [0], [0], [1], [0, 0, 1, 1], [], []>} : vector<32x32xf32>, vector<32x4xf32>, vector<32x4xf32> -> vector<32x4xf32>
    %cst_7 = arith.constant 2.000000e+00 : f32
    %6 = vector.broadcast %cst_7 : f32 to vector<32x4xf32>
    %7 = arith.mulf %6, %5 : vector<32x4xf32>
    %8 = arith.subf %7, %1 : vector<32x4xf32>
    %cst_8 = arith.constant dense<0.000000e+00> : vector<32x32xf32>
    %9 = tpu.matmul %0, %3, %cst_8 {dimension_numbers = #tpu.dot_dimension_numbers<[1], [0], [0], [1], [0, 0, 1, 1], [], []>} : vector<32x32xf32>, vector<32x32xf32>, vector<32x32xf32> -> vector<32x32xf32>
    %cst_9 = arith.constant dense<0.000000e+00> : vector<32x32xf32>
    %10 = tpu.matmul %0, %9, %cst_9 {dimension_numbers = #tpu.dot_dimension_numbers<[1], [0], [0], [1], [0, 0, 1, 1], [], []>} : vector<32x32xf32>, vector<32x32xf32>, vector<32x32xf32> -> vector<32x32xf32>
    %cst_10 = arith.constant 2.000000e+00 : f32
    %11 = vector.broadcast %cst_10 : f32 to vector<32x32xf32>
    %12 = arith.mulf %11, %10 : vector<32x32xf32>
    %13 = arith.subf %12, %3 : vector<32x32xf32>
    %14 = tpu.concatenate %1, %3, %4, %9, %8, %13 in 1 : vector<32x4xf32>, vector<32x32xf32>, vector<32x4xf32>, vector<32x32xf32>, vector<32x4xf32>, vector<32x32xf32> -> vector<32x108xf32>
    %c0_11 = arith.constant 0 : index
    %c0_12 = arith.constant 0 : index
    %15 = vector.load %arg3[%c0_11, %c0_12] : memref<108x64xf32, #tpu.memory_space<vmem>>, vector<108x64xf32>
    %cst_13 = arith.constant dense<0.000000e+00> : vector<32x64xf32>
    %16 = tpu.matmul %14, %15, %cst_13 {dimension_numbers = #tpu.dot_dimension_numbers<[1], [0], [0], [1], [0, 0, 1, 1], [], []>} : vector<32x108xf32>, vector<108x64xf32>, vector<32x64xf32> -> vector<32x64xf32>
    %c0_14 = arith.constant 0 : index
    %c0_15 = arith.constant 0 : index
    %17 = vector.load %arg4[%c0_14, %c0_15] : memref<1x64xf32, #tpu.memory_space<vmem>>, vector<1x64xf32>
    %18 = vector.broadcast %17 : vector<1x64xf32> to vector<32x64xf32>
    %19 = arith.addf %16, %18 : vector<32x64xf32>
    %20 = arith.negf %19 : vector<32x64xf32>
    %21 = math.exp %20 : vector<32x64xf32>
    %cst_16 = arith.constant 1.000000e+00 : f32
    %22 = vector.broadcast %cst_16 : f32 to vector<32x64xf32>
    %23 = arith.addf %22, %21 : vector<32x64xf32>
    %24 = arith.divf %22, %23 : vector<32x64xf32>
    %25 = vector.extract_strided_slice %24 {offsets = [0, 0], sizes = [32, 32], strides = [1, 1]} : vector<32x64xf32> to vector<32x32xf32>
    %26 = vector.extract_strided_slice %24 {offsets = [0, 32], sizes = [32, 32], strides = [1, 1]} : vector<32x64xf32> to vector<32x32xf32>
    %27 = arith.mulf %25, %3 : vector<32x32xf32>
    %cst_17 = arith.constant dense<0.000000e+00> : vector<32x32xf32>
    %28 = tpu.matmul %0, %27, %cst_17 {dimension_numbers = #tpu.dot_dimension_numbers<[1], [0], [0], [1], [0, 0, 1, 1], [], []>} : vector<32x32xf32>, vector<32x32xf32>, vector<32x32xf32> -> vector<32x32xf32>
    %cst_18 = arith.constant dense<0.000000e+00> : vector<32x32xf32>
    %29 = tpu.matmul %0, %28, %cst_18 {dimension_numbers = #tpu.dot_dimension_numbers<[1], [0], [0], [1], [0, 0, 1, 1], [], []>} : vector<32x32xf32>, vector<32x32xf32>, vector<32x32xf32> -> vector<32x32xf32>
    %cst_19 = arith.constant 2.000000e+00 : f32
    %30 = vector.broadcast %cst_19 : f32 to vector<32x32xf32>
    %31 = arith.mulf %30, %29 : vector<32x32xf32>
    %32 = arith.subf %31, %27 : vector<32x32xf32>
    %33 = tpu.concatenate %1, %27, %4, %28, %8, %32 in 1 : vector<32x4xf32>, vector<32x32xf32>, vector<32x4xf32>, vector<32x32xf32>, vector<32x4xf32>, vector<32x32xf32> -> vector<32x108xf32>
    %c0_20 = arith.constant 0 : index
    %c0_21 = arith.constant 0 : index
    %34 = vector.load %arg5[%c0_20, %c0_21] : memref<108x32xf32, #tpu.memory_space<vmem>>, vector<108x32xf32>
    %cst_22 = arith.constant dense<0.000000e+00> : vector<32x32xf32>
    %35 = tpu.matmul %33, %34, %cst_22 {dimension_numbers = #tpu.dot_dimension_numbers<[1], [0], [0], [1], [0, 0, 1, 1], [], []>} : vector<32x108xf32>, vector<108x32xf32>, vector<32x32xf32> -> vector<32x32xf32>
    %c0_23 = arith.constant 0 : index
    %c0_24 = arith.constant 0 : index
    %36 = vector.load %arg6[%c0_23, %c0_24] : memref<1x32xf32, #tpu.memory_space<vmem>>, vector<1x32xf32>
    %37 = vector.broadcast %36 : vector<1x32xf32> to vector<32x32xf32>
    %38 = arith.addf %35, %37 : vector<32x32xf32>
    %39 = math.tanh %38 : vector<32x32xf32>
    %40 = arith.mulf %26, %3 : vector<32x32xf32>
    %cst_25 = arith.constant 1.000000e+00 : f32
    %41 = vector.broadcast %cst_25 : f32 to vector<32x32xf32>
    %42 = arith.subf %41, %26 : vector<32x32xf32>
    %43 = arith.mulf %42, %39 : vector<32x32xf32>
    %44 = arith.addf %40, %43 : vector<32x32xf32>
    %c0_26 = arith.constant 0 : index
    %c0_27 = arith.constant 0 : index
    %c0_28 = arith.constant 0 : index
    %45 = vector.load %arg11[%c0_26, %c0_27, %c0_28] : memref<2x32x32xf32, #tpu.memory_space<vmem>>, vector<1x32x32xf32>
    %46 = vector.shape_cast %45 : vector<1x32x32xf32> to vector<32x32xf32>
    %47 = vector.shape_cast %44 : vector<32x32xf32> to vector<1x32x32xf32>
    tpu.vector_store %arg11[%c0_26, %c0_27, %c0_28], %47 {strides = array<i32>} : memref<2x32x32xf32, #tpu.memory_space<vmem>>, vector<1x32x32xf32>,
    %c1 = arith.constant 1 : index
    %c0_29 = arith.constant 0 : index
    %c0_30 = arith.constant 0 : index
    %48 = vector.load %arg1[%c1, %c0_29, %c0_30] : memref<2x32x32xf32, #tpu.memory_space<vmem>>, vector<1x32x32xf32>
    %49 = vector.shape_cast %48 : vector<1x32x32xf32> to vector<32x32xf32>
    %cst_31 = arith.constant dense<0.000000e+00> : vector<32x32xf32>
    %50 = tpu.matmul %0, %44, %cst_31 {dimension_numbers = #tpu.dot_dimension_numbers<[1], [0], [0], [1], [0, 0, 1, 1], [], []>} : vector<32x32xf32>, vector<32x32xf32>, vector<32x32xf32> -> vector<32x32xf32>
    %cst_32 = arith.constant dense<0.000000e+00> : vector<32x32xf32>
    %51 = tpu.matmul %0, %50, %cst_32 {dimension_numbers = #tpu.dot_dimension_numbers<[1], [0], [0], [1], [0, 0, 1, 1], [], []>} : vector<32x32xf32>, vector<32x32xf32>, vector<32x32xf32> -> vector<32x32xf32>
    %cst_33 = arith.constant 2.000000e+00 : f32
    %52 = vector.broadcast %cst_33 : f32 to vector<32x32xf32>
    %53 = arith.mulf %52, %51 : vector<32x32xf32>
    %54 = arith.subf %53, %44 : vector<32x32xf32>
    %cst_34 = arith.constant dense<0.000000e+00> : vector<32x32xf32>
    %55 = tpu.matmul %0, %49, %cst_34 {dimension_numbers = #tpu.dot_dimension_numbers<[1], [0], [0], [1], [0, 0, 1, 1], [], []>} : vector<32x32xf32>, vector<32x32xf32>, vector<32x32xf32> -> vector<32x32xf32>
    %cst_35 = arith.constant dense<0.000000e+00> : vector<32x32xf32>
    %56 = tpu.matmul %0, %55, %cst_35 {dimension_numbers = #tpu.dot_dimension_numbers<[1], [0], [0], [1], [0, 0, 1, 1], [], []>} : vector<32x32xf32>, vector<32x32xf32>, vector<32x32xf32> -> vector<32x32xf32>
    %cst_36 = arith.constant 2.000000e+00 : f32
    %57 = vector.broadcast %cst_36 : f32 to vector<32x32xf32>
    %58 = arith.mulf %57, %56 : vector<32x32xf32>
    %59 = arith.subf %58, %49 : vector<32x32xf32>
    %60 = tpu.concatenate %44, %49, %50, %55, %54, %59 in 1 : vector<32x32xf32>, vector<32x32xf32>, vector<32x32xf32>, vector<32x32xf32>, vector<32x32xf32>, vector<32x32xf32> -> vector<32x192xf32>
    %c0_37 = arith.constant 0 : index
    %c0_38 = arith.constant 0 : index
    %61 = vector.load %arg7[%c0_37, %c0_38] : memref<192x64xf32, #tpu.memory_space<vmem>>, vector<192x64xf32>
    %cst_39 = arith.constant dense<0.000000e+00> : vector<32x64xf32>
    %62 = tpu.matmul %60, %61, %cst_39 {dimension_numbers = #tpu.dot_dimension_numbers<[1], [0], [0], [1], [0, 0, 1, 1], [], []>} : vector<32x192xf32>, vector<192x64xf32>, vector<32x64xf32> -> vector<32x64xf32>
    %c0_40 = arith.constant 0 : index
    %c0_41 = arith.constant 0 : index
    %63 = vector.load %arg8[%c0_40, %c0_41] : memref<1x64xf32, #tpu.memory_space<vmem>>, vector<1x64xf32>
    %64 = vector.broadcast %63 : vector<1x64xf32> to vector<32x64xf32>
    %65 = arith.addf %62, %64 : vector<32x64xf32>
    %66 = arith.negf %65 : vector<32x64xf32>
    %67 = math.exp %66 : vector<32x64xf32>
    %cst_42 = arith.constant 1.000000e+00 : f32
    %68 = vector.broadcast %cst_42 : f32 to vector<32x64xf32>
    %69 = arith.addf %68, %67 : vector<32x64xf32>
    %70 = arith.divf %68, %69 : vector<32x64xf32>
    %71 = vector.extract_strided_slice %70 {offsets = [0, 0], sizes = [32, 32], strides = [1, 1]} : vector<32x64xf32> to vector<32x32xf32>
    %72 = vector.extract_strided_slice %70 {offsets = [0, 32], sizes = [32, 32], strides = [1, 1]} : vector<32x64xf32> to vector<32x32xf32>
    %73 = arith.mulf %71, %49 : vector<32x32xf32>
    %cst_43 = arith.constant dense<0.000000e+00> : vector<32x32xf32>
    %74 = tpu.matmul %0, %73, %cst_43 {dimension_numbers = #tpu.dot_dimension_numbers<[1], [0], [0], [1], [0, 0, 1, 1], [], []>} : vector<32x32xf32>, vector<32x32xf32>, vector<32x32xf32> -> vector<32x32xf32>
    %cst_44 = arith.constant dense<0.000000e+00> : vector<32x32xf32>
    %75 = tpu.matmul %0, %74, %cst_44 {dimension_numbers = #tpu.dot_dimension_numbers<[1], [0], [0], [1], [0, 0, 1, 1], [], []>} : vector<32x32xf32>, vector<32x32xf32>, vector<32x32xf32> -> vector<32x32xf32>
    %cst_45 = arith.constant 2.000000e+00 : f32
    %76 = vector.broadcast %cst_45 : f32 to vector<32x32xf32>
    %77 = arith.mulf %76, %75 : vector<32x32xf32>
    %78 = arith.subf %77, %73 : vector<32x32xf32>
    %79 = tpu.concatenate %44, %73, %50, %74, %54, %78 in 1 : vector<32x32xf32>, vector<32x32xf32>, vector<32x32xf32>, vector<32x32xf32>, vector<32x32xf32>, vector<32x32xf32> -> vector<32x192xf32>
    %c0_46 = arith.constant 0 : index
    %c0_47 = arith.constant 0 : index
    %80 = vector.load %arg9[%c0_46, %c0_47] : memref<192x32xf32, #tpu.memory_space<vmem>>, vector<192x32xf32>
    %cst_48 = arith.constant dense<0.000000e+00> : vector<32x32xf32>
    %81 = tpu.matmul %79, %80, %cst_48 {dimension_numbers = #tpu.dot_dimension_numbers<[1], [0], [0], [1], [0, 0, 1, 1], [], []>} : vector<32x192xf32>, vector<192x32xf32>, vector<32x32xf32> -> vector<32x32xf32>
    %c0_49 = arith.constant 0 : index
    %c0_50 = arith.constant 0 : index
    %82 = vector.load %arg10[%c0_49, %c0_50] : memref<1x32xf32, #tpu.memory_space<vmem>>, vector<1x32xf32>
    %83 = vector.broadcast %82 : vector<1x32xf32> to vector<32x32xf32>
    %84 = arith.addf %81, %83 : vector<32x32xf32>
    %85 = math.tanh %84 : vector<32x32xf32>
    %86 = arith.mulf %72, %49 : vector<32x32xf32>
    %cst_51 = arith.constant 1.000000e+00 : f32
    %87 = vector.broadcast %cst_51 : f32 to vector<32x32xf32>
    %88 = arith.subf %87, %72 : vector<32x32xf32>
    %89 = arith.mulf %88, %85 : vector<32x32xf32>
    %90 = arith.addf %86, %89 : vector<32x32xf32>
    %c1_52 = arith.constant 1 : index
    %c0_53 = arith.constant 0 : index
    %c0_54 = arith.constant 0 : index
    %91 = vector.load %arg11[%c1_52, %c0_53, %c0_54] : memref<2x32x32xf32, #tpu.memory_space<vmem>>, vector<1x32x32xf32>
    %92 = vector.shape_cast %91 : vector<1x32x32xf32> to vector<32x32xf32>
    %93 = vector.shape_cast %90 : vector<32x32xf32> to vector<1x32x32xf32>
    tpu.vector_store %arg11[%c1_52, %c0_53, %c0_54], %93 {strides = array<i32>} : memref<2x32x32xf32, #tpu.memory_space<vmem>>, vector<1x32x32xf32>,
    return
  }
}

</mosaic_0001>

<llo_original>
// kernel: tpu_custom_call.1
$region0: #{tpu_custom_call.1}
  #allocation0 [shape = 'u32[]', space=smem, size = 0x4, offset = 0x4, fixed_abs, tag = 'smem constant byte address 0x4 - core index']
  #allocation1 [shape = 'u32[144,128]{1,0:T(1,128)}', space=vmem, size = 0x12000, scoped, tag = 'internal scratch']
  %s0 = inlined_call_operand.vmem [shape: f32[32,4], index: 0, kind: input, shape index: {}]
  %s1 = inlined_call_operand.vmem [shape: f32[2,32,32], index: 1, kind: input, shape index: {}]
  %s2 = inlined_call_operand.vmem [shape: f32[32,32], index: 2, kind: input, shape index: {}]
  %s3 = inlined_call_operand.vmem [shape: f32[108,64], index: 3, kind: input, shape index: {}]
  %s4 = inlined_call_operand.vmem [shape: f32[1,64], index: 4, kind: input, shape index: {}]
  %s5 = inlined_call_operand.vmem [shape: f32[108,32], index: 5, kind: input, shape index: {}]
  %s6 = inlined_call_operand.vmem [shape: f32[1,32], index: 6, kind: input, shape index: {}]
  %s7 = inlined_call_operand.vmem [shape: f32[192,64], index: 7, kind: input, shape index: {}]
  %s8 = inlined_call_operand.vmem [shape: f32[1,64], index: 8, kind: input, shape index: {}]
  %s9 = inlined_call_operand.vmem [shape: f32[192,32], index: 9, kind: input, shape index: {}]
  %s10 = inlined_call_operand.vmem [shape: f32[1,32], index: 10, kind: input, shape index: {}]
  %s11 = inlined_call_operand.hbm [shape: f32[2,32,32], index: 11, kind: output, shape index: {}]
  %s12 = sld [smem:[#allocation0]]
  $region54: #{tpu_custom_call.1} parent=0
    _
  %s14 = ssub.s32 1, %s12
  %s15 = scalar_select 0, %s14, %s12
  $region1: #{tpu_custom_call.1} parent=0
    #allocation2 [shape = 'u8[32768]{0}', space=vmem, size = 0x8000, scoped, tag = 'output window, operand 0, single buffered']
    #allocation3 [shape = 's32[1]{0}', space=sflag, size = 0x4, scoped, tag = 'scoped memory for tpu_custom_call.1']
    %16 = vsyncpa [#allocation3], 0
    // Predicated region
    $region2: #{tpu_custom_call.1} parent=1 // pred_check
      _
    $region3: #{tpu_custom_call.1} parent=1 // pred_check_branch
      %18 = sbr.rel (0) target = $region5
    $region4: #{tpu_custom_call.1} parent=1 // pred_region
      _
    $region5: #{tpu_custom_call.1} parent=1 // pred_fallthru
      _
    // Predicated region
    $region6: #{tpu_custom_call.1} parent=1 // pred_check
      _
    $region7: #{tpu_custom_call.1} parent=1 // pred_check_branch
      %20 = sbr.rel (0) target = $region9
    $region8: #{tpu_custom_call.1} parent=1 // pred_region
      _
    $region9: #{tpu_custom_call.1} parent=1 // pred_fallthru
      _
    // Predicated region
    $region10: #{tpu_custom_call.1} parent=1 // pred_check
      _
    $region11: #{tpu_custom_call.1} parent=1 // pred_check_branch
      %22 = sbr.rel (0) target = $region13
    $region12: #{tpu_custom_call.1} parent=1 // pred_region
      _
    $region13: #{tpu_custom_call.1} parent=1 // pred_fallthru
      _
    // Predicated region
    $region14: #{tpu_custom_call.1} parent=1 // pred_check
      _
    $region15: #{tpu_custom_call.1} parent=1 // pred_check_branch
      %24 = sbr.rel (0) target = $region17
    $region16: #{tpu_custom_call.1} parent=1 // pred_region
      _
    $region17: #{tpu_custom_call.1} parent=1 // pred_fallthru
      _
    // Predicated region
    $region18: #{tpu_custom_call.1} parent=1 // pred_check
      _
    $region19: #{tpu_custom_call.1} parent=1 // pred_check_branch
      %26 = sbr.rel (0) target = $region21
    $region20: #{tpu_custom_call.1} parent=1 // pred_region
      _
    $region21: #{tpu_custom_call.1} parent=1 // pred_fallthru
      _
    // Predicated region
    $region22: #{tpu_custom_call.1} parent=1 // pred_check
      _
    $region23: #{tpu_custom_call.1} parent=1 // pred_check_branch
      %28 = sbr.rel (0) target = $region25
    $region24: #{tpu_custom_call.1} parent=1 // pred_region
      _
    $region25: #{tpu_custom_call.1} parent=1 // pred_fallthru
      _
    // Predicated region
    $region26: #{tpu_custom_call.1} parent=1 // pred_check
      _
    $region27: #{tpu_custom_call.1} parent=1 // pred_check_branch
      %30 = sbr.rel (0) target = $region29
    $region28: #{tpu_custom_call.1} parent=1 // pred_region
      _
    $region29: #{tpu_custom_call.1} parent=1 // pred_fallthru
      _
    // Predicated region
    $region30: #{tpu_custom_call.1} parent=1 // pred_check
      _
    $region31: #{tpu_custom_call.1} parent=1 // pred_check_branch
      %32 = sbr.rel (0) target = $region33
    $region32: #{tpu_custom_call.1} parent=1 // pred_region
      _
    $region33: #{tpu_custom_call.1} parent=1 // pred_fallthru
      _
    // Predicated region
    $region34: #{tpu_custom_call.1} parent=1 // pred_check
      _
    $region35: #{tpu_custom_call.1} parent=1 // pred_check_branch
      %34 = sbr.rel (0) target = $region37
    $region36: #{tpu_custom_call.1} parent=1 // pred_region
      _
    $region37: #{tpu_custom_call.1} parent=1 // pred_fallthru
      _
    // Predicated region
    $region38: #{tpu_custom_call.1} parent=1 // pred_check
      _
    $region39: #{tpu_custom_call.1} parent=1 // pred_check_branch
      %36 = sbr.rel (0) target = $region41
    $region40: #{tpu_custom_call.1} parent=1 // pred_region
      _
    $region41: #{tpu_custom_call.1} parent=1 // pred_fallthru
      _
    // Predicated region
    $region42: #{tpu_custom_call.1} parent=1 // pred_check
      _
    $region43: #{tpu_custom_call.1} parent=1 // pred_check_branch
      %38 = sbr.rel (0) target = $region45
    $region44: #{tpu_custom_call.1} parent=1 // pred_region
      _
    $region45: #{tpu_custom_call.1} parent=1 // pred_fallthru
      _
    %v39 = vld [vmem:[%s2] sm:$0xff]
    %v40 = vld [vmem:[%s2 + $0x8] sm:$0xff]
    %v41 = vld [vmem:[%s2 + $0x10] sm:$0xff]
    %v42 = vld [vmem:[%s2 + $0x18] sm:$0xff]
    %v43 = vld [vmem:[%s0] sm:$0xff]
    %v44 = vld [vmem:[%s0 + $0x8] sm:$0xff]
    %v45 = vld [vmem:[%s0 + $0x10] sm:$0xff]
    %v46 = vld [vmem:[%s0 + $0x18] sm:$0xff]
    %v47 = vld [vmem:[%s1] sm:$0xff]
    %v48 = vld [vmem:[%s1 + $0x8] sm:$0xff]
    %v49 = vld [vmem:[%s1 + $0x10] sm:$0xff]
    %v50 = vld [vmem:[%s1 + $0x18] sm:$0xff]
    %vm51 = vcmask 261120
    %v53 = vsel %vm51, %v39, 0
    %v56 = vsel %vm51, %v40, 0
    %v59 = vsel %vm51, %v41, 0
    %v62 = vsel %vm51, %v42, 0
    %64 = vmatprep.subr.mxu0 0.0
    %65 = vmatpush1.msra.mxu0 %v43
    %66 = vmatprep.subr.mxu0 0.0
    %67 = vmatpush1.msra.mxu0 %v44
    %68 = vmatprep.subr.mxu0 0.0
    %69 = vmatpush1.msra.mxu0 %v45
    %70 = vmatprep.subr.mxu0 0.0
    %71 = vmatpush1.msra.mxu0 %v46
    %72 = vmatprep.subr.mxu0 0.0
    %73 = vmatpush1.msra.mxu0 0.0
    %74 = vmatprep.subr.mxu0 0.0
    %75 = vmatpush1.msra.mxu0 0.0
    %76 = vmatprep.subr.mxu0 0.0
    %77 = vmatpush1.msra.mxu0 0.0
    %78 = vmatprep.subr.mxu0 0.0
    %79 = vmatpush1.msra.mxu0 0.0
    %80 = vmatprep.subr.mxu0 0.0
    %81 = vmatpush1.msra.mxu0 0.0
    %82 = vmatprep.subr.mxu0 0.0
    %83 = vmatpush1.msra.mxu0 0.0
    %84 = vmatprep.subr.mxu0 0.0
    %85 = vmatpush1.msra.mxu0 0.0
    %86 = vmatprep.subr.mxu0 0.0
    %87 = vmatpush1.msra.mxu0 0.0
    %88 = vmatprep.subr.mxu0 0.0
    %89 = vmatpush1.msra.mxu0 0.0
    %90 = vmatprep.subr.mxu0 0.0
    %91 = vmatpush1.msra.mxu0 0.0
    %92 = vmatprep.subr.mxu0 0.0
    %93 = vmatpush1.msra.mxu0 0.0
    %94 = vmatprep.subr.mxu0 0.0
    %95 = vmatpush1.msra.mxu0 0.0
    %96 = vmatprep.subr.mxu0 0.0
    %97 = vmatpush1.msra.mxu0 0.0
    %98 = vmatprep.subr.mxu0 0.0
    %99 = vmatpush1.msra.mxu0 0.0
    %100 = vmatprep.subr.mxu0 0.0
    %101 = vmatpush1.msra.mxu0 0.0
    %102 = vmatprep.subr.mxu0 0.0
    %103 = vmatpush1.msra.mxu0 0.0
    %104 = vmatprep.subr.mxu0 0.0
    %105 = vmatpush1.msra.mxu0 0.0
    %106 = vmatprep.subr.mxu0 0.0
    %107 = vmatpush1.msra.mxu0 0.0
    %108 = vmatprep.subr.mxu0 0.0
    %109 = vmatpush1.msra.mxu0 0.0
    %110 = vmatprep.subr.mxu0 0.0
    %111 = vmatpush1.msra.mxu0 0.0
    %112 = vmatprep.subr.mxu0 0.0
    %113 = vmatpush1.msra.mxu0 0.0
    %114 = vmatprep.subr.mxu0 0.0
    %115 = vmatpush1.msra.mxu0 0.0
    %116 = vmatprep.subr.mxu0 0.0
    %117 = vmatpush1.msra.mxu0 0.0
    %118 = vmatprep.subr.mxu0 0.0
    %119 = vmatpush1.msra.mxu0 0.0
    %120 = vmatprep.subr.mxu0 0.0
    %121 = vmatpush1.msra.mxu0 0.0
    %122 = vmatprep.subr.mxu0 0.0
    %123 = vmatpush1.msra.mxu0 0.0
    %124 = vmatprep.subr.mxu0 0.0
    %125 = vmatpush1.msra.mxu0 0.0
    %126 = vmatprep.subr.mxu0 0.0
    %127 = vmatpush1.msra.mxu0 0.0
    %128 = vmatprep.mubr.f32.mxu0 0.0
    %129 = vmatmul.mubr.f32.gmra.mrb[0].mxu0 %v53
    %v130 = vpop.f32.mrb[0].mxu0
    %v131 = vadd.f32 0.0, %v130
    %v132 = vpop.f32.mrb[0].mxu0
    %133 = vmatprep.mubr.f32.mxu0 0.0
    %134 = vmatmul.mubr.f32.gmra.mrb[0].mxu0 %v56
    %v135 = vpop.f32.mrb[0].mxu0
    %v136 = vadd.f32 0.0, %v135
    %v137 = vpop.f32.mrb[0].mxu0
    %138 = vmatprep.mubr.f32.mxu0 0.0
    %139 = vmatmul.mubr.f32.gmra.mrb[0].mxu0 %v59
    %v140 = vpop.f32.mrb[0].mxu0
    %v141 = vadd.f32 0.0, %v140
    %v142 = vpop.f32.mrb[0].mxu0
    %143 = vmatprep.mubr.f32.mxu0 0.0
    %144 = vmatmul.mubr.f32.gmra.mrb[0].mxu0 %v62
    %v145 = vpop.f32.mrb[0].mxu0
    %v146 = vadd.f32 0.0, %v145
    %v147 = vpop.f32.mrb[0].mxu0
    %148 = vdwg.mxu0
    %149 = vmatprep.subr.mxu0 0.0
    %150 = vmatpush1.msra.mxu0 %v131
    %151 = vmatprep.subr.mxu0 0.0
    %152 = vmatpush1.msra.mxu0 %v136
    %153 = vmatprep.subr.mxu0 0.0
    %154 = vmatpush1.msra.mxu0 %v141
    %155 = vmatprep.subr.mxu0 0.0
    %156 = vmatpush1.msra.mxu0 %v146
    %157 = vmatprep.subr.mxu0 0.0
    %158 = vmatpush1.msra.mxu0 0.0
    %159 = vmatprep.subr.mxu0 0.0
    %160 = vmatpush1.msra.mxu0 0.0
    %161 = vmatprep.subr.mxu0 0.0
    %162 = vmatpush1.msra.mxu0 0.0
    %163 = vmatprep.subr.mxu0 0.0
    %164 = vmatpush1.msra.mxu0 0.0
    %165 = vmatprep.subr.mxu0 0.0
    %166 = vmatpush1.msra.mxu0 0.0
    %167 = vmatprep.subr.mxu0 0.0
    %168 = vmatpush1.msra.mxu0 0.0
    %169 = vmatprep.subr.mxu0 0.0
    %170 = vmatpush1.msra.mxu0 0.0
    %171 = vmatprep.subr.mxu0 0.0
    %172 = vmatpush1.msra.mxu0 0.0
    %173 = vmatprep.subr.mxu0 0.0
    %174 = vmatpush1.msra.mxu0 0.0
    %175 = vmatprep.subr.mxu0 0.0
    %176 = vmatpush1.msra.mxu0 0.0
    %177 = vmatprep.subr.mxu0 0.0
    %178 = vmatpush1.msra.mxu0 0.0
    %179 = vmatprep.subr.mxu0 0.0
    %180 = vmatpush1.msra.mxu0 0.0
    %181 = vmatprep.subr.mxu0 0.0
    %182 = vmatpush1.msra.mxu0 0.0
    %183 = vmatprep.subr.mxu0 0.0
    %184 = vmatpush1.msra.mxu0 0.0
    %185 = vmatprep.subr.mxu0 0.0
    %186 = vmatpush1.msra.mxu0 0.0
    %187 = vmatprep.subr.mxu0 0.0
    %188 = vmatpush1.msra.mxu0 0.0
    %189 = vmatprep.subr.mxu0 0.0
    %190 = vmatpush1.msra.mxu0 0.0
    %191 = vmatprep.subr.mxu0 0.0
    %192 = vmatpush1.msra.mxu0 0.0
    %193 = vmatprep.subr.mxu0 0.0
    %194 = vmatpush1.msra.mxu0 0.0
    %195 = vmatprep.subr.mxu0 0.0
    %196 = vmatpush1.msra.mxu0 0.0
    %197 = vmatprep.subr.mxu0 0.0
    %198 = vmatpush1.msra.mxu0 0.0
    %199 = vmatprep.subr.mxu0 0.0
    %200 = vmatpush1.msra.mxu0 0.0
    %201 = vmatprep.subr.mxu0 0.0
    %202 = vmatpush1.msra.mxu0 0.0
    %203 = vmatprep.subr.mxu0 0.0
    %204 = vmatpush1.msra.mxu0 0.0
    %205 = vmatprep.subr.mxu0 0.0
    %206 = vmatpush1.msra.mxu0 0.0
    %207 = vmatprep.subr.mxu0 0.0
    %208 = vmatpush1.msra.mxu0 0.0
    %209 = vmatprep.subr.mxu0 0.0
    %210 = vmatpush1.msra.mxu0 0.0
    %211 = vmatprep.subr.mxu0 0.0
    %212 = vmatpush1.msra.mxu0 0.0
    %213 = vmatprep.mubr.f32.mxu0 0.0
    %214 = vmatmul.mubr.f32.gmra.mrb[0].mxu0 %v53
    %v215 = vpop.f32.mrb[0].mxu0
    %v216 = vadd.f32 0.0, %v215
    %v217 = vpop.f32.mrb[0].mxu0
    %218 = vmatprep.mubr.f32.mxu0 0.0
    %219 = vmatmul.mubr.f32.gmra.mrb[0].mxu0 %v56
    %v220 = vpop.f32.mrb[0].mxu0
    %v221 = vadd.f32 0.0, %v220
    %v222 = vpop.f32.mrb[0].mxu0
    %223 = vmatprep.mubr.f32.mxu0 0.0
    %224 = vmatmul.mubr.f32.gmra.mrb[0].mxu0 %v59
    %v225 = vpop.f32.mrb[0].mxu0
    %v226 = vadd.f32 0.0, %v225
    %v227 = vpop.f32.mrb[0].mxu0
    %228 = vmatprep.mubr.f32.mxu0 0.0
    %229 = vmatmul.mubr.f32.gmra.mrb[0].mxu0 %v62
    %v230 = vpop.f32.mrb[0].mxu0
    %v231 = vadd.f32 0.0, %v230
    %v232 = vpop.f32.mrb[0].mxu0
    %233 = vdwg.mxu0
    %v234 = vmul.f32 %v216, 2.0
    %v235 = vmul.f32 %v221, 2.0
    %v236 = vmul.f32 %v226, 2.0
    %v237 = vmul.f32 %v231, 2.0
    %v238 = vsub.f32 %v234, %v43
    %v239 = vsub.f32 %v235, %v44
    %v240 = vsub.f32 %v236, %v45
    %v241 = vsub.f32 %v237, %v46
    %242 = vmatprep.subr.mxu0 0.0
    %243 = vmatpush1.msra.mxu0 %v47
    %244 = vmatprep.subr.mxu0 0.0
    %245 = vmatpush1.msra.mxu0 %v48
    %246 = vmatprep.subr.mxu0 0.0
    %247 = vmatpush1.msra.mxu0 %v49
    %248 = vmatprep.subr.mxu0 0.0
    %249 = vmatpush1.msra.mxu0 %v50
    %250 = vmatprep.subr.mxu0 0.0
    %251 = vmatpush1.msra.mxu0 0.0
    %252 = vmatprep.subr.mxu0 0.0
    %253 = vmatpush1.msra.mxu0 0.0
    %254 = vmatprep.subr.mxu0 0.0
    %255 = vmatpush1.msra.mxu0 0.0
    %256 = vmatprep.subr.mxu0 0.0
    %257 = vmatpush1.msra.mxu0 0.0
    %258 = vmatprep.subr.mxu0 0.0
    %259 = vmatpush1.msra.mxu0 0.0
    %260 = vmatprep.subr.mxu0 0.0
    %261 = vmatpush1.msra.mxu0 0.0
    %262 = vmatprep.subr.mxu0 0.0
    %263 = vmatpush1.msra.mxu0 0.0
    %264 = vmatprep.subr.mxu0 0.0
    %265 = vmatpush1.msra.mxu0 0.0
    %266 = vmatprep.subr.mxu0 0.0
    %267 = vmatpush1.msra.mxu0 0.0
    %268 = vmatprep.subr.mxu0 0.0
    %269 = vmatpush1.msra.mxu0 0.0
    %270 = vmatprep.subr.mxu0 0.0
    %271 = vmatpush1.msra.mxu0 0.0
    %272 = vmatprep.subr.mxu0 0.0
    %273 = vmatpush1.msra.mxu0 0.0
    %274 = vmatprep.subr.mxu0 0.0
    %275 = vmatpush1.msra.mxu0 0.0
    %276 = vmatprep.subr.mxu0 0.0
    %277 = vmatpush1.msra.mxu0 0.0
    %278 = vmatprep.subr.mxu0 0.0
    %279 = vmatpush1.msra.mxu0 0.0
    %280 = vmatprep.subr.mxu0 0.0
    %281 = vmatpush1.msra.mxu0 0.0
    %282 = vmatprep.subr.mxu0 0.0
    %283 = vmatpush1.msra.mxu0 0.0
    %284 = vmatprep.subr.mxu0 0.0
    %285 = vmatpush1.msra.mxu0 0.0
    %286 = vmatprep.subr.mxu0 0.0
    %287 = vmatpush1.msra.mxu0 0.0
    %288 = vmatprep.subr.mxu0 0.0
    %289 = vmatpush1.msra.mxu0 0.0
    %290 = vmatprep.subr.mxu0 0.0
    %291 = vmatpush1.msra.mxu0 0.0
    %292 = vmatprep.subr.mxu0 0.0
    %293 = vmatpush1.msra.mxu0 0.0
    %294 = vmatprep.subr.mxu0 0.0
    %295 = vmatpush1.msra.mxu0 0.0
    %296 = vmatprep.subr.mxu0 0.0
    %297 = vmatpush1.msra.mxu0 0.0
    %298 = vmatprep.subr.mxu0 0.0
    %299 = vmatpush1.msra.mxu0 0.0
    %300 = vmatprep.subr.mxu0 0.0
    %301 = vmatpush1.msra.mxu0 0.0
    %302 = vmatprep.subr.mxu0 0.0
    %303 = vmatpush1.msra.mxu0 0.0
    %304 = vmatprep.subr.mxu0 0.0
    %305 = vmatpush1.msra.mxu0 0.0
    %306 = vmatprep.mubr.f32.mxu0 0.0
    %307 = vmatmul.mubr.f32.gmra.mrb[0].mxu0 %v53
    %v308 = vpop.f32.mrb[0].mxu0
    %v309 = vadd.f32 0.0, %v308
    %v310 = vpop.f32.mrb[0].mxu0
    %311 = vmatprep.mubr.f32.mxu0 0.0
    %312 = vmatmul.mubr.f32.gmra.mrb[0].mxu0 %v56
    %v313 = vpop.f32.mrb[0].mxu0
    %v314 = vadd.f32 0.0, %v313
    %v315 = vpop.f32.mrb[0].mxu0
    %316 = vmatprep.mubr.f32.mxu0 0.0
    %317 = vmatmul.mubr.f32.gmra.mrb[0].mxu0 %v59
    %v318 = vpop.f32.mrb[0].mxu0
    %v319 = vadd.f32 0.0, %v318
    %v320 = vpop.f32.mrb[0].mxu0
    %321 = vmatprep.mubr.f32.mxu0 0.0
    %322 = vmatmul.mubr.f32.gmra.mrb[0].mxu0 %v62
    %v323 = vpop.f32.mrb[0].mxu0
    %v324 = vadd.f32 0.0, %v323
    %v325 = vpop.f32.mrb[0].mxu0
    %326 = vdwg.mxu0
    %327 = vmatprep.subr.mxu0 0.0
    %328 = vmatpush1.msra.mxu0 %v309
    %329 = vmatprep.subr.mxu0 0.0
    %330 = vmatpush1.msra.mxu0 %v314
    %331 = vmatprep.subr.mxu0 0.0
    %332 = vmatpush1.msra.mxu0 %v319
    %333 = vmatprep.subr.mxu0 0.0
    %334 = vmatpush1.msra.mxu0 %v324
    %335 = vmatprep.subr.mxu0 0.0
    %336 = vmatpush1.msra.mxu0 0.0
    %337 = vmatprep.subr.mxu0 0.0
    %338 = vmatpush1.msra.mxu0 0.0
    %339 = vmatprep.subr.mxu0 0.0
    %340 = vmatpush1.msra.mxu0 0.0
    %341 = vmatprep.subr.mxu0 0.0
    %342 = vmatpush1.msra.mxu0 0.0
    %343 = vmatprep.subr.mxu0 0.0
    %344 = vmatpush1.msra.mxu0 0.0
    %345 = vmatprep.subr.mxu0 0.0
    %346 = vmatpush1.msra.mxu0 0.0
    %347 = vmatprep.subr.mxu0 0.0
    %348 = vmatpush1.msra.mxu0 0.0
    %349 = vmatprep.subr.mxu0 0.0
    %350 = vmatpush1.msra.mxu0 0.0
    %351 = vmatprep.subr.mxu0 0.0
    %352 = vmatpush1.msra.mxu0 0.0
    %353 = vmatprep.subr.mxu0 0.0
    %354 = vmatpush1.msra.mxu0 0.0
    %355 = vmatprep.subr.mxu0 0.0
    %356 = vmatpush1.msra.mxu0 0.0
    %357 = vmatprep.subr.mxu0 0.0
    %358 = vmatpush1.msra.mxu0 0.0
    %359 = vmatprep.subr.mxu0 0.0
    %360 = vmatpush1.msra.mxu0 0.0
    %361 = vmatprep.subr.mxu0 0.0
    %362 = vmatpush1.msra.mxu0 0.0
    %363 = vmatprep.subr.mxu0 0.0
    %364 = vmatpush1.msra.mxu0 0.0
    %365 = vmatprep.subr.mxu0 0.0
    %366 = vmatpush1.msra.mxu0 0.0
    %367 = vmatprep.subr.mxu0 0.0
    %368 = vmatpush1.msra.mxu0 0.0
    %369 = vmatprep.subr.mxu0 0.0
    %370 = vmatpush1.msra.mxu0 0.0
    %371 = vmatprep.subr.mxu0 0.0
    %372 = vmatpush1.msra.mxu0 0.0
    %373 = vmatprep.subr.mxu0 0.0
    %374 = vmatpush1.msra.mxu0 0.0
    %375 = vmatprep.subr.mxu0 0.0
    %376 = vmatpush1.msra.mxu0 0.0
    %377 = vmatprep.subr.mxu0 0.0
    %378 = vmatpush1.msra.mxu0 0.0
    %379 = vmatprep.subr.mxu0 0.0
    %380 = vmatpush1.msra.mxu0 0.0
    %381 = vmatprep.subr.mxu0 0.0
    %382 = vmatpush1.msra.mxu0 0.0
    %383 = vmatprep.subr.mxu0 0.0
    %384 = vmatpush1.msra.mxu0 0.0
    %385 = vmatprep.subr.mxu0 0.0
    %386 = vmatpush1.msra.mxu0 0.0
    %387 = vmatprep.subr.mxu0 0.0
    %388 = vmatpush1.msra.mxu0 0.0
    %389 = vmatprep.subr.mxu0 0.0
    %390 = vmatpush1.msra.mxu0 0.0
    %391 = vmatprep.mubr.f32.mxu0 0.0
    %392 = vmatmul.mubr.f32.gmra.mrb[0].mxu0 %v53
    %v393 = vpop.f32.mrb[0].mxu0
    %v394 = vadd.f32 0.0, %v393
    %v395 = vpop.f32.mrb[0].mxu0
    %396 = vmatprep.mubr.f32.mxu0 0.0
    %397 = vmatmul.mubr.f32.gmra.mrb[0].mxu0 %v56
    %v398 = vpop.f32.mrb[0].mxu0
    %v399 = vadd.f32 0.0, %v398
    %v400 = vpop.f32.mrb[0].mxu0
    %401 = vmatprep.mubr.f32.mxu0 0.0
    %402 = vmatmul.mubr.f32.gmra.mrb[0].mxu0 %v59
    %v403 = vpop.f32.mrb[0].mxu0
    %v404 = vadd.f32 0.0, %v403
    %v405 = vpop.f32.mrb[0].mxu0
    %406 = vmatprep.mubr.f32.mxu0 0.0
    %407 = vmatmul.mubr.f32.gmra.mrb[0].mxu0 %v62
    %v408 = vpop.f32.mrb[0].mxu0
    %v409 = vadd.f32 0.0, %v408
    %v410 = vpop.f32.mrb[0].mxu0
    %411 = vdwg.mxu0
    %v412 = vmul.f32 %v394, 2.0
    %v413 = vmul.f32 %v399, 2.0
    %v414 = vmul.f32 %v404, 2.0
    %v415 = vmul.f32 %v409, 2.0
    %v416 = vsub.f32 %v412, %v47
    %v417 = vsub.f32 %v413, %v48
    %v418 = vsub.f32 %v414, %v49
    %v419 = vsub.f32 %v415, %v50
    %424 = vrot.lane.b32.xlu0 %v47, 4
    %v425 = vpop.permute.xlu0 %424
    %426 = vrot.lane.b32.xlu0 %v48, 4
    %v427 = vpop.permute.xlu0 %426
    %428 = vrot.lane.b32.xlu0 %v49, 4
    %v429 = vpop.permute.xlu0 %428
    %430 = vrot.lane.b32.xlu0 %v50, 4
    %v431 = vpop.permute.xlu0 %430
    %440 = vrot.lane.b32.xlu0 %v131, 36
    %v441 = vpop.permute.xlu0 %440
    %442 = vrot.lane.b32.xlu0 %v136, 36
    %v443 = vpop.permute.xlu0 %442
    %444 = vrot.lane.b32.xlu0 %v141, 36
    %v445 = vpop.permute.xlu0 %444
    %446 = vrot.lane.b32.xlu0 %v146, 36
    %v447 = vpop.permute.xlu0 %446
    %456 = vrot.lane.b32.xlu0 %v309, 40
    %v457 = vpop.permute.xlu0 %456
    %458 = vrot.lane.b32.xlu0 %v314, 40
    %v459 = vpop.permute.xlu0 %458
    %460 = vrot.lane.b32.xlu0 %v319, 40
    %v461 = vpop.permute.xlu0 %460
    %462 = vrot.lane.b32.xlu0 %v324, 40
    %v463 = vpop.permute.xlu0 %462
    %472 = vrot.lane.b32.xlu0 %v238, 72
    %v473 = vpop.permute.xlu0 %472
    %474 = vrot.lane.b32.xlu0 %v239, 72
    %v475 = vpop.permute.xlu0 %474
    %476 = vrot.lane.b32.xlu0 %v240, 72
    %v477 = vpop.permute.xlu0 %476
    %478 = vrot.lane.b32.xlu0 %v241, 72
    %v479 = vpop.permute.xlu0 %478
    %488 = vrot.lane.b32.xlu0 %v416, 76
    %v489 = vpop.permute.xlu0 %488
    %490 = vrot.lane.b32.xlu0 %v417, 76
    %v491 = vpop.permute.xlu0 %490
    %492 = vrot.lane.b32.xlu0 %v418, 76
    %v493 = vpop.permute.xlu0 %492
    %494 = vrot.lane.b32.xlu0 %v419, 76
    %v495 = vpop.permute.xlu0 %494
    %vm500 = vcmask 31744
    %v501 = vsel %vm500, %v43, %v425
    %v502 = vsel %vm500, %v44, %v427
    %v503 = vsel %vm500, %v45, %v429
    %v504 = vsel %vm500, %v46, %v431
    %vm505 = vcmask 293888
    %v506 = vsel %vm505, %v501, %v441
    %v507 = vsel %vm505, %v502, %v443
    %v508 = vsel %vm505, %v503, %v445
    %v509 = vsel %vm505, %v504, %v447
    %vm510 = vcmask 326656
    %v511 = vsel %vm510, %v506, %v457
    %v512 = vsel %vm510, %v507, %v459
    %v513 = vsel %vm510, %v508, %v461
    %v514 = vsel %vm510, %v509, %v463
    %vm515 = vcmask 588800
    %v516 = vsel %vm515, %v511, %v473
    %v517 = vsel %vm515, %v512, %v475
    %v518 = vsel %vm515, %v513, %v477
    %v519 = vsel %vm515, %v514, %v479
    %vm520 = vcmask 621568
    %v521 = vsel %vm520, %v516, %v489
    %v522 = vsel %vm520, %v517, %v491
    %v523 = vsel %vm520, %v518, %v493
    %v524 = vsel %vm520, %v519, %v495
    %v525 = vld [vmem:[%s3] sm:$0xff]
    %v526 = vld [vmem:[%s3 + $0x8] sm:$0xff]
    %v527 = vld [vmem:[%s3 + $0x10] sm:$0xff]
    %v528 = vld [vmem:[%s3 + $0x18] sm:$0xff]
    %v529 = vld [vmem:[%s3 + $0x20] sm:$0xff]
    %v530 = vld [vmem:[%s3 + $0x28] sm:$0xff]
    %v531 = vld [vmem:[%s3 + $0x30] sm:$0xff]
    %v532 = vld [vmem:[%s3 + $0x38] sm:$0xff]
    %v533 = vld [vmem:[%s3 + $0x40] sm:$0xff]
    %v534 = vld [vmem:[%s3 + $0x48] sm:$0xff]
    %v535 = vld [vmem:[%s3 + $0x50] sm:$0xff]
    %v536 = vld [vmem:[%s3 + $0x58] sm:$0xff]
    %v537 = vld [vmem:[%s3 + $0x60] sm:$0xff]
    %v538 = vld [vmem:[%s3 + $0x68] sm:$0xf]
    %v539 = vld [vmem:[%s4] sm:$0x1]
    %v541 = vlaneseq
    %v542 = vshrl.u32 %v541, 7
    %v543 = vsub.s32 0, %v542
    %v544 = vrot.slane %v539, %v543
    %vm546 = vcmask 883712
    %v548 = vsel %vm546, %v521, 0
    %v551 = vsel %vm546, %v522, 0
    %v554 = vsel %vm546, %v523, 0
    %v557 = vsel %vm546, %v524, 0
    %vm559 = vcmask 1043456
    %v561 = vsel %vm559, %v538, 0
    %563 = vmatprep.subr.mxu0 0.0
    %564 = vmatpush1.msra.mxu0 %v525
    %565 = vmatprep.subr.mxu0 0.0
    %566 = vmatpush1.msra.mxu0 %v526
    %567 = vmatprep.subr.mxu0 0.0
    %568 = vmatpush1.msra.mxu0 %v527
    %569 = vmatprep.subr.mxu0 0.0
    %570 = vmatpush1.msra.mxu0 %v528
    %571 = vmatprep.subr.mxu0 0.0
    %572 = vmatpush1.msra.mxu0 %v529
    %573 = vmatprep.subr.mxu0 0.0
    %574 = vmatpush1.msra.mxu0 %v530
    %575 = vmatprep.subr.mxu0 0.0
    %576 = vmatpush1.msra.mxu0 %v531
    %577 = vmatprep.subr.mxu0 0.0
    %578 = vmatpush1.msra.mxu0 %v532
    %579 = vmatprep.subr.mxu0 0.0
    %580 = vmatpush1.msra.mxu0 %v533
    %581 = vmatprep.subr.mxu0 0.0
    %582 = vmatpush1.msra.mxu0 %v534
    %583 = vmatprep.subr.mxu0 0.0
    %584 = vmatpush1.msra.mxu0 %v535
    %585 = vmatprep.subr.mxu0 0.0
    %586 = vmatpush1.msra.mxu0 %v536
    %587 = vmatprep.subr.mxu0 0.0
    %588 = vmatpush1.msra.mxu0 %v537
    %589 = vmatprep.subr.mxu0 0.0
    %590 = vmatpush1.msra.mxu0 %v561
    %591 = vmatprep.subr.mxu0 0.0
    %592 = vmatpush1.msra.mxu0 0.0
    %593 = vmatprep.subr.mxu0 0.0
    %594 = vmatpush1.msra.mxu0 0.0
    %595 = vmatprep.subr.mxu0 0.0
    %596 = vmatpush1.msra.mxu0 0.0
    %597 = vmatprep.subr.mxu0 0.0
    %598 = vmatpush1.msra.mxu0 0.0
    %599 = vmatprep.subr.mxu0 0.0
    %600 = vmatpush1.msra.mxu0 0.0
    %601 = vmatprep.subr.mxu0 0.0
    %602 = vmatpush1.msra.mxu0 0.0
    %603 = vmatprep.subr.mxu0 0.0
    %604 = vmatpush1.msra.mxu0 0.0
    %605 = vmatprep.subr.mxu0 0.0
    %606 = vmatpush1.msra.mxu0 0.0
    %607 = vmatprep.subr.mxu0 0.0
    %608 = vmatpush1.msra.mxu0 0.0
    %609 = vmatprep.subr.mxu0 0.0
    %610 = vmatpush1.msra.mxu0 0.0
    %611 = vmatprep.subr.mxu0 0.0
    %612 = vmatpush1.msra.mxu0 0.0
    %613 = vmatprep.subr.mxu0 0.0
    %614 = vmatpush1.msra.mxu0 0.0
    %615 = vmatprep.subr.mxu0 0.0
    %616 = vmatpush1.msra.mxu0 0.0
    %617 = vmatprep.subr.mxu0 0.0
    %618 = vmatpush1.msra.mxu0 0.0
    %619 = vmatprep.subr.mxu0 0.0
    %620 = vmatpush1.msra.mxu0 0.0
    %621 = vmatprep.subr.mxu0 0.0
    %622 = vmatpush1.msra.mxu0 0.0
    %623 = vmatprep.subr.mxu0 0.0
    %624 = vmatpush1.msra.mxu0 0.0
    %625 = vmatprep.subr.mxu0 0.0
    %626 = vmatpush1.msra.mxu0 0.0
    %627 = vmatprep.mubr.f32.mxu0 0.0
    %628 = vmatmul.mubr.f32.gmra.mrb[0].mxu0 %v548
    %v629 = vpop.f32.mrb[0].mxu0
    %v630 = vadd.f32 %v544, %v629
    %v631 = vpop.f32.mrb[0].mxu0
    %632 = vmatprep.mubr.f32.mxu0 0.0
    %633 = vmatmul.mubr.f32.gmra.mrb[0].mxu0 %v551
    %v634 = vpop.f32.mrb[0].mxu0
    %v635 = vadd.f32 %v544, %v634
    %v636 = vpop.f32.mrb[0].mxu0
    %637 = vmatprep.mubr.f32.mxu0 0.0
    %638 = vmatmul.mubr.f32.gmra.mrb[0].mxu0 %v554
    %v639 = vpop.f32.mrb[0].mxu0
    %v640 = vadd.f32 %v544, %v639
    %v641 = vpop.f32.mrb[0].mxu0
    %642 = vmatprep.mubr.f32.mxu0 0.0
    %643 = vmatmul.mubr.f32.gmra.mrb[0].mxu0 %v557
    %v644 = vpop.f32.mrb[0].mxu0
    %v645 = vadd.f32 %v544, %v644
    %v646 = vpop.f32.mrb[0].mxu0
    %647 = vdwg.mxu0
    %v648 = vxor.u32 %v630, 2147483648
    %v649 = vxor.u32 %v635, 2147483648
    %v650 = vxor.u32 %v640, 2147483648
    %v651 = vxor.u32 %v645, 2147483648
    %v652 = vmul.f32 %v648, 1.442695
    %v653 = vpow.pop %v652
    %v654 = vmul.f32 %v649, 1.442695
    %v655 = vpow.pop %v654
    %v656 = vmul.f32 %v650, 1.442695
    %v657 = vpow.pop %v656
    %v658 = vmul.f32 %v651, 1.442695
    %v659 = vpow.pop %v658
    %v660 = vadd.f32 %v653, 1.0
    %v661 = vadd.f32 %v655, 1.0
    %v662 = vadd.f32 %v657, 1.0
    %v663 = vadd.f32 %v659, 1.0
    %v664 = vrcp.pop %v660
    %v665 = vmul.f32 1.0, %v664
    %v666 = vrcp.pop %v661
    %v667 = vmul.f32 1.0, %v666
    %v668 = vrcp.pop %v662
    %v669 = vmul.f32 1.0, %v668
    %v670 = vrcp.pop %v663
    %v671 = vmul.f32 1.0, %v670
    %v672 = vmul.f32 %v665, %v47
    %v673 = vmul.f32 %v667, %v48
    %v674 = vmul.f32 %v669, %v49
    %v675 = vmul.f32 %v671, %v50
    %676 = vmatprep.subr.mxu0 0.0
    %677 = vmatpush1.msra.mxu0 %v672
    %678 = vmatprep.subr.mxu0 0.0
    %679 = vmatpush1.msra.mxu0 %v673
    %680 = vmatprep.subr.mxu0 0.0
    %681 = vmatpush1.msra.mxu0 %v674
    %682 = vmatprep.subr.mxu0 0.0
    %683 = vmatpush1.msra.mxu0 %v675
    %684 = vmatprep.subr.mxu0 0.0
    %685 = vmatpush1.msra.mxu0 0.0
    %686 = vmatprep.subr.mxu0 0.0
    %687 = vmatpush1.msra.mxu0 0.0
    %688 = vmatprep.subr.mxu0 0.0
    %689 = vmatpush1.msra.mxu0 0.0
    %690 = vmatprep.subr.mxu0 0.0
    %691 = vmatpush1.msra.mxu0 0.0
    %692 = vmatprep.subr.mxu0 0.0
    %693 = vmatpush1.msra.mxu0 0.0
    %694 = vmatprep.subr.mxu0 0.0
    %695 = vmatpush1.msra.mxu0 0.0
    %696 = vmatprep.subr.mxu0 0.0
    %697 = vmatpush1.msra.mxu0 0.0
    %698 = vmatprep.subr.mxu0 0.0
    %699 = vmatpush1.msra.mxu0 0.0
    %700 = vmatprep.subr.mxu0 0.0
    %701 = vmatpush1.msra.mxu0 0.0
    %702 = vmatprep.subr.mxu0 0.0
    %703 = vmatpush1.msra.mxu0 0.0
    %704 = vmatprep.subr.mxu0 0.0
    %705 = vmatpush1.msra.mxu0 0.0
    %706 = vmatprep.subr.mxu0 0.0
    %707 = vmatpush1.msra.mxu0 0.0
    %708 = vmatprep.subr.mxu0 0.0
    %709 = vmatpush1.msra.mxu0 0.0
    %710 = vmatprep.subr.mxu0 0.0
    %711 = vmatpush1.msra.mxu0 0.0
    %712 = vmatprep.subr.mxu0 0.0
    %713 = vmatpush1.msra.mxu0 0.0
    %714 = vmatprep.subr.mxu0 0.0
    %715 = vmatpush1.msra.mxu0 0.0
    %716 = vmatprep.subr.mxu0 0.0
    %717 = vmatpush1.msra.mxu0 0.0
    %718 = vmatprep.subr.mxu0 0.0
    %719 = vmatpush1.msra.mxu0 0.0
    %720 = vmatprep.subr.mxu0 0.0
    %721 = vmatpush1.msra.mxu0 0.0
    %722 = vmatprep.subr.mxu0 0.0
    %723 = vmatpush1.msra.mxu0 0.0
    %724 = vmatprep.subr.mxu0 0.0
    %725 = vmatpush1.msra.mxu0 0.0
    %726 = vmatprep.subr.mxu0 0.0
    %727 = vmatpush1.msra.mxu0 0.0
    %728 = vmatprep.subr.mxu0 0.0
    %729 = vmatpush1.msra.mxu0 0.0
    %730 = vmatprep.subr.mxu0 0.0
    %731 = vmatpush1.msra.mxu0 0.0
    %732 = vmatprep.subr.mxu0 0.0
    %733 = vmatpush1.msra.mxu0 0.0
    %734 = vmatprep.subr.mxu0 0.0
    %735 = vmatpush1.msra.mxu0 0.0
    %736 = vmatprep.subr.mxu0 0.0
    %737 = vmatpush1.msra.mxu0 0.0
    %738 = vmatprep.subr.mxu0 0.0
    %739 = vmatpush1.msra.mxu0 0.0
    %740 = vmatprep.mubr.f32.mxu0 0.0
    %741 = vmatmul.mubr.f32.gmra.mrb[0].mxu0 %v53
    %v742 = vpop.f32.mrb[0].mxu0
    %v743 = vadd.f32 0.0, %v742
    %v744 = vpop.f32.mrb[0].mxu0
    %745 = vmatprep.mubr.f32.mxu0 0.0
    %746 = vmatmul.mubr.f32.gmra.mrb[0].mxu0 %v56
    %v747 = vpop.f32.mrb[0].mxu0
    %v748 = vadd.f32 0.0, %v747
    %v749 = vpop.f32.mrb[0].mxu0
    %750 = vmatprep.mubr.f32.mxu0 0.0
    %751 = vmatmul.mubr.f32.gmra.mrb[0].mxu0 %v59
    %v752 = vpop.f32.mrb[0].mxu0
    %v753 = vadd.f32 0.0, %v752
    %v754 = vpop.f32.mrb[0].mxu0
    %755 = vmatprep.mubr.f32.mxu0 0.0
    %756 = vmatmul.mubr.f32.gmra.mrb[0].mxu0 %v62
    %v757 = vpop.f32.mrb[0].mxu0
    %v758 = vadd.f32 0.0, %v757
    %v759 = vpop.f32.mrb[0].mxu0
    %760 = vdwg.mxu0
    %761 = vmatprep.subr.mxu0 0.0
    %762 = vmatpush1.msra.mxu0 %v743
    %763 = vmatprep.subr.mxu0 0.0
    %764 = vmatpush1.msra.mxu0 %v748
    %765 = vmatprep.subr.mxu0 0.0
    %766 = vmatpush1.msra.mxu0 %v753
    %767 = vmatprep.subr.mxu0 0.0
    %768 = vmatpush1.msra.mxu0 %v758
    %769 = vmatprep.subr.mxu0 0.0
    %770 = vmatpush1.msra.mxu0 0.0
    %771 = vmatprep.subr.mxu0 0.0
    %772 = vmatpush1.msra.mxu0 0.0
    %773 = vmatprep.subr.mxu0 0.0
    %774 = vmatpush1.msra.mxu0 0.0
    %775 = vmatprep.subr.mxu0 0.0
    %776 = vmatpush1.msra.mxu0 0.0
    %777 = vmatprep.subr.mxu0 0.0
    %778 = vmatpush1.msra.mxu0 0.0
    %779 = vmatprep.subr.mxu0 0.0
    %780 = vmatpush1.msra.mxu0 0.0
    %781 = vmatprep.subr.mxu0 0.0
    %782 = vmatpush1.msra.mxu0 0.0
    %783 = vmatprep.subr.mxu0 0.0
    %784 = vmatpush1.msra.mxu0 0.0
    %785 = vmatprep.subr.mxu0 0.0
    %786 = vmatpush1.msra.mxu0 0.0
    %787 = vmatprep.subr.mxu0 0.0
    %788 = vmatpush1.msra.mxu0 0.0
    %789 = vmatprep.subr.mxu0 0.0
    %790 = vmatpush1.msra.mxu0 0.0
    %791 = vmatprep.subr.mxu0 0.0
    %792 = vmatpush1.msra.mxu0 0.0
    %793 = vmatprep.subr.mxu0 0.0
    %794 = vmatpush1.msra.mxu0 0.0
    %795 = vmatprep.subr.mxu0 0.0
    %796 = vmatpush1.msra.mxu0 0.0
    %797 = vmatprep.subr.mxu0 0.0
    %798 = vmatpush1.msra.mxu0 0.0
    %799 = vmatprep.subr.mxu0 0.0
    %800 = vmatpush1.msra.mxu0 0.0
    %801 = vmatprep.subr.mxu0 0.0
    %802 = vmatpush1.msra.mxu0 0.0
    %803 = vmatprep.subr.mxu0 0.0
    %804 = vmatpush1.msra.mxu0 0.0
    %805 = vmatprep.subr.mxu0 0.0
    %806 = vmatpush1.msra.mxu0 0.0
    %807 = vmatprep.subr.mxu0 0.0
    %808 = vmatpush1.msra.mxu0 0.0
    %809 = vmatprep.subr.mxu0 0.0
    %810 = vmatpush1.msra.mxu0 0.0
    %811 = vmatprep.subr.mxu0 0.0
    %812 = vmatpush1.msra.mxu0 0.0
    %813 = vmatprep.subr.mxu0 0.0
    %814 = vmatpush1.msra.mxu0 0.0
    %815 = vmatprep.subr.mxu0 0.0
    %816 = vmatpush1.msra.mxu0 0.0
    %817 = vmatprep.subr.mxu0 0.0
    %818 = vmatpush1.msra.mxu0 0.0
    %819 = vmatprep.subr.mxu0 0.0
    %820 = vmatpush1.msra.mxu0 0.0
    %821 = vmatprep.subr.mxu0 0.0
    %822 = vmatpush1.msra.mxu0 0.0
    %823 = vmatprep.subr.mxu0 0.0
    %824 = vmatpush1.msra.mxu0 0.0
    %825 = vmatprep.mubr.f32.mxu0 0.0
    %826 = vmatmul.mubr.f32.gmra.mrb[0].mxu0 %v53
    %v827 = vpop.f32.mrb[0].mxu0
    %v828 = vadd.f32 0.0, %v827
    %v829 = vpop.f32.mrb[0].mxu0
    %830 = vmatprep.mubr.f32.mxu0 0.0
    %831 = vmatmul.mubr.f32.gmra.mrb[0].mxu0 %v56
    %v832 = vpop.f32.mrb[0].mxu0
    %v833 = vadd.f32 0.0, %v832
    %v834 = vpop.f32.mrb[0].mxu0
    %835 = vmatprep.mubr.f32.mxu0 0.0
    %836 = vmatmul.mubr.f32.gmra.mrb[0].mxu0 %v59
    %v837 = vpop.f32.mrb[0].mxu0
    %v838 = vadd.f32 0.0, %v837
    %v839 = vpop.f32.mrb[0].mxu0
    %840 = vmatprep.mubr.f32.mxu0 0.0
    %841 = vmatmul.mubr.f32.gmra.mrb[0].mxu0 %v62
    %v842 = vpop.f32.mrb[0].mxu0
    %v843 = vadd.f32 0.0, %v842
    %v844 = vpop.f32.mrb[0].mxu0
    %845 = vdwg.mxu0
    %v846 = vmul.f32 %v828, 2.0
    %v847 = vmul.f32 %v833, 2.0
    %v848 = vmul.f32 %v838, 2.0
    %v849 = vmul.f32 %v843, 2.0
    %v850 = vsub.f32 %v846, %v672
    %v851 = vsub.f32 %v847, %v673
    %v852 = vsub.f32 %v848, %v674
    %v853 = vsub.f32 %v849, %v675
    %858 = vrot.lane.b32.xlu0 %v672, 4
    %v859 = vpop.permute.xlu0 %858
    %860 = vrot.lane.b32.xlu0 %v673, 4
    %v861 = vpop.permute.xlu0 %860
    %862 = vrot.lane.b32.xlu0 %v674, 4
    %v863 = vpop.permute.xlu0 %862
    %864 = vrot.lane.b32.xlu0 %v675, 4
    %v865 = vpop.permute.xlu0 %864
    %874 = vrot.lane.b32.xlu0 %v743, 40
    %v875 = vpop.permute.xlu0 %874
    %876 = vrot.lane.b32.xlu0 %v748, 40
    %v877 = vpop.permute.xlu0 %876
    %878 = vrot.lane.b32.xlu0 %v753, 40
    %v879 = vpop.permute.xlu0 %878
    %880 = vrot.lane.b32.xlu0 %v758, 40
    %v881 = vpop.permute.xlu0 %880
    %890 = vrot.lane.b32.xlu0 %v850, 76
    %v891 = vpop.permute.xlu0 %890
    %892 = vrot.lane.b32.xlu0 %v851, 76
    %v893 = vpop.permute.xlu0 %892
    %894 = vrot.lane.b32.xlu0 %v852, 76
    %v895 = vpop.permute.xlu0 %894
    %896 = vrot.lane.b32.xlu0 %v853, 76
    %v897 = vpop.permute.xlu0 %896
    %v902 = vsel %vm500, %v43, %v859
    %v903 = vsel %vm500, %v44, %v861
    %v904 = vsel %vm500, %v45, %v863
    %v905 = vsel %vm500, %v46, %v865
    %v906 = vsel %vm505, %v902, %v441
    %v907 = vsel %vm505, %v903, %v443
    %v908 = vsel %vm505, %v904, %v445
    %v909 = vsel %vm505, %v905, %v447
    %v910 = vsel %vm510, %v906, %v875
    %v911 = vsel %vm510, %v907, %v877
    %v912 = vsel %vm510, %v908, %v879
    %v913 = vsel %vm510, %v909, %v881
    %v914 = vsel %vm515, %v910, %v473
    %v915 = vsel %vm515, %v911, %v475
    %v916 = vsel %vm515, %v912, %v477
    %v917 = vsel %vm515, %v913, %v479
    %v918 = vsel %vm520, %v914, %v891
    %v919 = vsel %vm520, %v915, %v893
    %v920 = vsel %vm520, %v916, %v895
    %v921 = vsel %vm520, %v917, %v897
    %v922 = vld [vmem:[%s5] sm:$0xff]
    %v923 = vld [vmem:[%s5 + $0x8] sm:$0xff]
    %v924 = vld [vmem:[%s5 + $0x10] sm:$0xff]
    %v925 = vld [vmem:[%s5 + $0x18] sm:$0xff]
    %v926 = vld [vmem:[%s5 + $0x20] sm:$0xff]
    %v927 = vld [vmem:[%s5 + $0x28] sm:$0xff]
    %v928 = vld [vmem:[%s5 + $0x30] sm:$0xff]
    %v929 = vld [vmem:[%s5 + $0x38] sm:$0xff]
    %v930 = vld [vmem:[%s5 + $0x40] sm:$0xff]
    %v931 = vld [vmem:[%s5 + $0x48] sm:$0xff]
    %v932 = vld [vmem:[%s5 + $0x50] sm:$0xff]
    %v933 = vld [vmem:[%s5 + $0x58] sm:$0xff]
    %v934 = vld [vmem:[%s5 + $0x60] sm:$0xff]
    %v935 = vld [vmem:[%s5 + $0x68] sm:$0xf]
    %v936 = vld [vmem:[%s6] sm:$0x1]
    %v938 = vlaneseq
    %v939 = vshrl.u32 %v938, 7
    %v940 = vsub.s32 0, %v939
    %v941 = vrot.slane %v936, %v940
    %v944 = vsel %vm546, %v918, 0
    %v947 = vsel %vm546, %v919, 0
    %v950 = vsel %vm546, %v920, 0
    %v953 = vsel %vm546, %v921, 0
    %v956 = vsel %vm559, %v935, 0
    %958 = vmatprep.subr.mxu0 0.0
    %959 = vmatpush1.msra.mxu0 %v922
    %960 = vmatprep.subr.mxu0 0.0
    %961 = vmatpush1.msra.mxu0 %v923
    %962 = vmatprep.subr.mxu0 0.0
    %963 = vmatpush1.msra.mxu0 %v924
    %964 = vmatprep.subr.mxu0 0.0
    %965 = vmatpush1.msra.mxu0 %v925
    %966 = vmatprep.subr.mxu0 0.0
    %967 = vmatpush1.msra.mxu0 %v926
    %968 = vmatprep.subr.mxu0 0.0
    %969 = vmatpush1.msra.mxu0 %v927
    %970 = vmatprep.subr.mxu0 0.0
    %971 = vmatpush1.msra.mxu0 %v928
    %972 = vmatprep.subr.mxu0 0.0
    %973 = vmatpush1.msra.mxu0 %v929
    %974 = vmatprep.subr.mxu0 0.0
    %975 = vmatpush1.msra.mxu0 %v930
    %976 = vmatprep.subr.mxu0 0.0
    %977 = vmatpush1.msra.mxu0 %v931
    %978 = vmatprep.subr.mxu0 0.0
    %979 = vmatpush1.msra.mxu0 %v932
    %980 = vmatprep.subr.mxu0 0.0
    %981 = vmatpush1.msra.mxu0 %v933
    %982 = vmatprep.subr.mxu0 0.0
    %983 = vmatpush1.msra.mxu0 %v934
    %984 = vmatprep.subr.mxu0 0.0
    %985 = vmatpush1.msra.mxu0 %v956
    %986 = vmatprep.subr.mxu0 0.0
    %987 = vmatpush1.msra.mxu0 0.0
    %988 = vmatprep.subr.mxu0 0.0
    %989 = vmatpush1.msra.mxu0 0.0
    %990 = vmatprep.subr.mxu0 0.0
    %991 = vmatpush1.msra.mxu0 0.0
    %992 = vmatprep.subr.mxu0 0.0
    %993 = vmatpush1.msra.mxu0 0.0
    %994 = vmatprep.subr.mxu0 0.0
    %995 = vmatpush1.msra.mxu0 0.0
    %996 = vmatprep.subr.mxu0 0.0
    %997 = vmatpush1.msra.mxu0 0.0
    %998 = vmatprep.subr.mxu0 0.0
    %999 = vmatpush1.msra.mxu0 0.0
    %1000 = vmatprep.subr.mxu0 0.0
    %1001 = vmatpush1.msra.mxu0 0.0
    %1002 = vmatprep.subr.mxu0 0.0
    %1003 = vmatpush1.msra.mxu0 0.0
    %1004 = vmatprep.subr.mxu0 0.0
    %1005 = vmatpush1.msra.mxu0 0.0
    %1006 = vmatprep.subr.mxu0 0.0
    %1007 = vmatpush1.msra.mxu0 0.0
    %1008 = vmatprep.subr.mxu0 0.0
    %1009 = vmatpush1.msra.mxu0 0.0
    %1010 = vmatprep.subr.mxu0 0.0
    %1011 = vmatpush1.msra.mxu0 0.0
    %1012 = vmatprep.subr.mxu0 0.0
    %1013 = vmatpush1.msra.mxu0 0.0
    %1014 = vmatprep.subr.mxu0 0.0
    %1015 = vmatpush1.msra.mxu0 0.0
    %1016 = vmatprep.subr.mxu0 0.0
    %1017 = vmatpush1.msra.mxu0 0.0
    %1018 = vmatprep.subr.mxu0 0.0
    %1019 = vmatpush1.msra.mxu0 0.0
    %1020 = vmatprep.subr.mxu0 0.0
    %1021 = vmatpush1.msra.mxu0 0.0
    %1022 = vmatprep.mubr.f32.mxu0 0.0
    %1023 = vmatmul.mubr.f32.gmra.mrb[0].mxu0 %v944
    %v1024 = vpop.f32.mrb[0].mxu0
    %v1025 = vadd.f32 %v941, %v1024
    %v1026 = vpop.f32.mrb[0].mxu0
    %1027 = vmatprep.mubr.f32.mxu0 0.0
    %1028 = vmatmul.mubr.f32.gmra.mrb[0].mxu0 %v947
    %v1029 = vpop.f32.mrb[0].mxu0
    %v1030 = vadd.f32 %v941, %v1029
    %v1031 = vpop.f32.mrb[0].mxu0
    %1032 = vmatprep.mubr.f32.mxu0 0.0
    %1033 = vmatmul.mubr.f32.gmra.mrb[0].mxu0 %v950
    %v1034 = vpop.f32.mrb[0].mxu0
    %v1035 = vadd.f32 %v941, %v1034
    %v1036 = vpop.f32.mrb[0].mxu0
    %1037 = vmatprep.mubr.f32.mxu0 0.0
    %1038 = vmatmul.mubr.f32.gmra.mrb[0].mxu0 %v953
    %v1039 = vpop.f32.mrb[0].mxu0
    %v1040 = vadd.f32 %v941, %v1039
    %v1041 = vpop.f32.mrb[0].mxu0
    %1042 = vdwg.mxu0
    %v1043 = vtanh.pop %v1025
    %v1044 = vtanh.pop %v1030
    %v1045 = vtanh.pop %v1035
    %v1046 = vtanh.pop %v1040
    %1047 = vrot.lane.b32.xlu0 %v47, 32
    %v1048 = vpop.permute.xlu0 %1047
    %1049 = vrot.lane.b32.xlu0 %v48, 32
    %v1050 = vpop.permute.xlu0 %1049
    %1051 = vrot.lane.b32.xlu0 %v49, 32
    %v1052 = vpop.permute.xlu0 %1051
    %1053 = vrot.lane.b32.xlu0 %v50, 32
    %v1054 = vpop.permute.xlu0 %1053
    %v1059 = vmul.f32 %v665, %v1048
    %v1060 = vmul.f32 %v667, %v1050
    %v1061 = vmul.f32 %v669, %v1052
    %v1062 = vmul.f32 %v671, %v1054
    %v1063 = vsub.f32 1.0, %v665
    %v1064 = vsub.f32 1.0, %v667
    %v1065 = vsub.f32 1.0, %v669
    %v1066 = vsub.f32 1.0, %v671
    %1071 = vrot.lane.b32.xlu0 %v1043, 32
    %v1072 = vpop.permute.xlu0 %1071
    %1073 = vrot.lane.b32.xlu0 %v1044, 32
    %v1074 = vpop.permute.xlu0 %1073
    %1075 = vrot.lane.b32.xlu0 %v1045, 32
    %v1076 = vpop.permute.xlu0 %1075
    %1077 = vrot.lane.b32.xlu0 %v1046, 32
    %v1078 = vpop.permute.xlu0 %1077
    %v1083 = vmul.f32 %v1063, %v1072
    %v1084 = vmul.f32 %v1064, %v1074
    %v1085 = vmul.f32 %v1065, %v1076
    %v1086 = vmul.f32 %v1066, %v1078
    %v1087 = vadd.f32 %v1059, %v1083
    %v1088 = vadd.f32 %v1060, %v1084
    %v1089 = vadd.f32 %v1061, %v1085
    %v1090 = vadd.f32 %v1062, %v1086
    %1095 = vrot.lane.b32.xlu0 %v1087, 96
    %v1096 = vpop.permute.xlu0 %1095
    %1097 = vrot.lane.b32.xlu0 %v1088, 96
    %v1098 = vpop.permute.xlu0 %1097
    %1099 = vrot.lane.b32.xlu0 %v1089, 96
    %v1100 = vpop.permute.xlu0 %1099
    %1101 = vrot.lane.b32.xlu0 %v1090, 96
    %v1102 = vpop.permute.xlu0 %1101
    %1107 = vst.msk [vmem:[#allocation2] sm:$0xff] %vm51, %v1096
    %1108 = vst.msk [vmem:[#allocation2 + $0x8] sm:$0xff] %vm51, %v1098
    %1109 = vst.msk [vmem:[#allocation2 + $0x10] sm:$0xff] %vm51, %v1100
    %1110 = vst.msk [vmem:[#allocation2 + $0x18] sm:$0xff] %vm51, %v1102
    %s1111 = scalar_lea.vmem %s1, 32
    %v1112 = vld [vmem:[%s1111] sm:$0xff]
    %v1113 = vld [vmem:[%s1111 + $0x8] sm:$0xff]
    %v1114 = vld [vmem:[%s1111 + $0x10] sm:$0xff]
    %v1115 = vld [vmem:[%s1111 + $0x18] sm:$0xff]
    %1116 = vmatprep.subr.mxu0 0.0
    %1117 = vmatpush1.msra.mxu0 %v1096
    %1118 = vmatprep.subr.mxu0 0.0
    %1119 = vmatpush1.msra.mxu0 %v1098
    %1120 = vmatprep.subr.mxu0 0.0
    %1121 = vmatpush1.msra.mxu0 %v1100
    %1122 = vmatprep.subr.mxu0 0.0
    %1123 = vmatpush1.msra.mxu0 %v1102
    %1124 = vmatprep.subr.mxu0 0.0
    %1125 = vmatpush1.msra.mxu0 0.0
    %1126 = vmatprep.subr.mxu0 0.0
    %1127 = vmatpush1.msra.mxu0 0.0
    %1128 = vmatprep.subr.mxu0 0.0
    %1129 = vmatpush1.msra.mxu0 0.0
    %1130 = vmatprep.subr.mxu0 0.0
    %1131 = vmatpush1.msra.mxu0 0.0
    %1132 = vmatprep.subr.mxu0 0.0
    %1133 = vmatpush1.msra.mxu0 0.0
    %1134 = vmatprep.subr.mxu0 0.0
    %1135 = vmatpush1.msra.mxu0 0.0
    %1136 = vmatprep.subr.mxu0 0.0
    %1137 = vmatpush1.msra.mxu0 0.0
    %1138 = vmatprep.subr.mxu0 0.0
    %1139 = vmatpush1.msra.mxu0 0.0
    %1140 = vmatprep.subr.mxu0 0.0
    %1141 = vmatpush1.msra.mxu0 0.0
    %1142 = vmatprep.subr.mxu0 0.0
    %1143 = vmatpush1.msra.mxu0 0.0
    %1144 = vmatprep.subr.mxu0 0.0
    %1145 = vmatpush1.msra.mxu0 0.0
    %1146 = vmatprep.subr.mxu0 0.0
    %1147 = vmatpush1.msra.mxu0 0.0
    %1148 = vmatprep.subr.mxu0 0.0
    %1149 = vmatpush1.msra.mxu0 0.0
    %1150 = vmatprep.subr.mxu0 0.0
    %1151 = vmatpush1.msra.mxu0 0.0
    %1152 = vmatprep.subr.mxu0 0.0
    %1153 = vmatpush1.msra.mxu0 0.0
    %1154 = vmatprep.subr.mxu0 0.0
    %1155 = vmatpush1.msra.mxu0 0.0
    %1156 = vmatprep.subr.mxu0 0.0
    %1157 = vmatpush1.msra.mxu0 0.0
    %1158 = vmatprep.subr.mxu0 0.0
    %1159 = vmatpush1.msra.mxu0 0.0
    %1160 = vmatprep.subr.mxu0 0.0
    %1161 = vmatpush1.msra.mxu0 0.0
    %1162 = vmatprep.subr.mxu0 0.0
    %1163 = vmatpush1.msra.mxu0 0.0
    %1164 = vmatprep.subr.mxu0 0.0
    %1165 = vmatpush1.msra.mxu0 0.0
    %1166 = vmatprep.subr.mxu0 0.0
    %1167 = vmatpush1.msra.mxu0 0.0
    %1168 = vmatprep.subr.mxu0 0.0
    %1169 = vmatpush1.msra.mxu0 0.0
    %1170 = vmatprep.subr.mxu0 0.0
    %1171 = vmatpush1.msra.mxu0 0.0
    %1172 = vmatprep.subr.mxu0 0.0
    %1173 = vmatpush1.msra.mxu0 0.0
    %1174 = vmatprep.subr.mxu0 0.0
    %1175 = vmatpush1.msra.mxu0 0.0
    %1176 = vmatprep.subr.mxu0 0.0
    %1177 = vmatpush1.msra.mxu0 0.0
    %1178 = vmatprep.subr.mxu0 0.0
    %1179 = vmatpush1.msra.mxu0 0.0
    %1180 = vmatprep.mubr.f32.mxu0 0.0
    %1181 = vmatmul.mubr.f32.gmra.mrb[0].mxu0 %v53
    %v1182 = vpop.f32.mrb[0].mxu0
    %v1183 = vadd.f32 0.0, %v1182
    %v1184 = vpop.f32.mrb[0].mxu0
    %1185 = vmatprep.mubr.f32.mxu0 0.0
    %1186 = vmatmul.mubr.f32.gmra.mrb[0].mxu0 %v56
    %v1187 = vpop.f32.mrb[0].mxu0
    %v1188 = vadd.f32 0.0, %v1187
    %v1189 = vpop.f32.mrb[0].mxu0
    %1190 = vmatprep.mubr.f32.mxu0 0.0
    %1191 = vmatmul.mubr.f32.gmra.mrb[0].mxu0 %v59
    %v1192 = vpop.f32.mrb[0].mxu0
    %v1193 = vadd.f32 0.0, %v1192
    %v1194 = vpop.f32.mrb[0].mxu0
    %1195 = vmatprep.mubr.f32.mxu0 0.0
    %1196 = vmatmul.mubr.f32.gmra.mrb[0].mxu0 %v62
    %v1197 = vpop.f32.mrb[0].mxu0
    %v1198 = vadd.f32 0.0, %v1197
    %v1199 = vpop.f32.mrb[0].mxu0
    %1200 = vdwg.mxu0
    %1201 = vmatprep.subr.mxu0 0.0
    %1202 = vmatpush1.msra.mxu0 %v1183
    %1203 = vmatprep.subr.mxu0 0.0
    %1204 = vmatpush1.msra.mxu0 %v1188
    %1205 = vmatprep.subr.mxu0 0.0
    %1206 = vmatpush1.msra.mxu0 %v1193
    %1207 = vmatprep.subr.mxu0 0.0
    %1208 = vmatpush1.msra.mxu0 %v1198
    %1209 = vmatprep.subr.mxu0 0.0
    %1210 = vmatpush1.msra.mxu0 0.0
    %1211 = vmatprep.subr.mxu0 0.0
    %1212 = vmatpush1.msra.mxu0 0.0
    %1213 = vmatprep.subr.mxu0 0.0
    %1214 = vmatpush1.msra.mxu0 0.0
    %1215 = vmatprep.subr.mxu0 0.0
    %1216 = vmatpush1.msra.mxu0 0.0
    %1217 = vmatprep.subr.mxu0 0.0
    %1218 = vmatpush1.msra.mxu0 0.0
    %1219 = vmatprep.subr.mxu0 0.0
    %1220 = vmatpush1.msra.mxu0 0.0
    %1221 = vmatprep.subr.mxu0 0.0
    %1222 = vmatpush1.msra.mxu0 0.0
    %1223 = vmatprep.subr.mxu0 0.0
    %1224 = vmatpush1.msra.mxu0 0.0
    %1225 = vmatprep.subr.mxu0 0.0
    %1226 = vmatpush1.msra.mxu0 0.0
    %1227 = vmatprep.subr.mxu0 0.0
    %1228 = vmatpush1.msra.mxu0 0.0
    %1229 = vmatprep.subr.mxu0 0.0
    %1230 = vmatpush1.msra.mxu0 0.0
    %1231 = vmatprep.subr.mxu0 0.0
    %1232 = vmatpush1.msra.mxu0 0.0
    %1233 = vmatprep.subr.mxu0 0.0
    %1234 = vmatpush1.msra.mxu0 0.0
    %1235 = vmatprep.subr.mxu0 0.0
    %1236 = vmatpush1.msra.mxu0 0.0
    %1237 = vmatprep.subr.mxu0 0.0
    %1238 = vmatpush1.msra.mxu0 0.0
    %1239 = vmatprep.subr.mxu0 0.0
    %1240 = vmatpush1.msra.mxu0 0.0
    %1241 = vmatprep.subr.mxu0 0.0
    %1242 = vmatpush1.msra.mxu0 0.0
    %1243 = vmatprep.subr.mxu0 0.0
    %1244 = vmatpush1.msra.mxu0 0.0
    %1245 = vmatprep.subr.mxu0 0.0
    %1246 = vmatpush1.msra.mxu0 0.0
    %1247 = vmatprep.subr.mxu0 0.0
    %1248 = vmatpush1.msra.mxu0 0.0
    %1249 = vmatprep.subr.mxu0 0.0
    %1250 = vmatpush1.msra.mxu0 0.0
    %1251 = vmatprep.subr.mxu0 0.0
    %1252 = vmatpush1.msra.mxu0 0.0
    %1253 = vmatprep.subr.mxu0 0.0
    %1254 = vmatpush1.msra.mxu0 0.0
    %1255 = vmatprep.subr.mxu0 0.0
    %1256 = vmatpush1.msra.mxu0 0.0
    %1257 = vmatprep.subr.mxu0 0.0
    %1258 = vmatpush1.msra.mxu0 0.0
    %1259 = vmatprep.subr.mxu0 0.0
    %1260 = vmatpush1.msra.mxu0 0.0
    %1261 = vmatprep.subr.mxu0 0.0
    %1262 = vmatpush1.msra.mxu0 0.0
    %1263 = vmatprep.subr.mxu0 0.0
    %1264 = vmatpush1.msra.mxu0 0.0
    %1265 = vmatprep.mubr.f32.mxu0 0.0
    %1266 = vmatmul.mubr.f32.gmra.mrb[0].mxu0 %v53
    %v1267 = vpop.f32.mrb[0].mxu0
    %v1268 = vadd.f32 0.0, %v1267
    %v1269 = vpop.f32.mrb[0].mxu0
    %1270 = vmatprep.mubr.f32.mxu0 0.0
    %1271 = vmatmul.mubr.f32.gmra.mrb[0].mxu0 %v56
    %v1272 = vpop.f32.mrb[0].mxu0
    %v1273 = vadd.f32 0.0, %v1272
    %v1274 = vpop.f32.mrb[0].mxu0
    %1275 = vmatprep.mubr.f32.mxu0 0.0
    %1276 = vmatmul.mubr.f32.gmra.mrb[0].mxu0 %v59
    %v1277 = vpop.f32.mrb[0].mxu0
    %v1278 = vadd.f32 0.0, %v1277
    %v1279 = vpop.f32.mrb[0].mxu0
    %1280 = vmatprep.mubr.f32.mxu0 0.0
    %1281 = vmatmul.mubr.f32.gmra.mrb[0].mxu0 %v62
    %v1282 = vpop.f32.mrb[0].mxu0
    %v1283 = vadd.f32 0.0, %v1282
    %v1284 = vpop.f32.mrb[0].mxu0
    %1285 = vdwg.mxu0
    %v1286 = vmul.f32 %v1268, 2.0
    %v1287 = vmul.f32 %v1273, 2.0
    %v1288 = vmul.f32 %v1278, 2.0
    %v1289 = vmul.f32 %v1283, 2.0
    %v1290 = vsub.f32 %v1286, %v1096
    %v1291 = vsub.f32 %v1287, %v1098
    %v1292 = vsub.f32 %v1288, %v1100
    %v1293 = vsub.f32 %v1289, %v1102
    %1294 = vmatprep.subr.mxu0 0.0
    %1295 = vmatpush1.msra.mxu0 %v1112
    %1296 = vmatprep.subr.mxu0 0.0
    %1297 = vmatpush1.msra.mxu0 %v1113
    %1298 = vmatprep.subr.mxu0 0.0
    %1299 = vmatpush1.msra.mxu0 %v1114
    %1300 = vmatprep.subr.mxu0 0.0
    %1301 = vmatpush1.msra.mxu0 %v1115
    %1302 = vmatprep.subr.mxu0 0.0
    %1303 = vmatpush1.msra.mxu0 0.0
    %1304 = vmatprep.subr.mxu0 0.0
    %1305 = vmatpush1.msra.mxu0 0.0
    %1306 = vmatprep.subr.mxu0 0.0
    %1307 = vmatpush1.msra.mxu0 0.0
    %1308 = vmatprep.subr.mxu0 0.0
    %1309 = vmatpush1.msra.mxu0 0.0
    %1310 = vmatprep.subr.mxu0 0.0
    %1311 = vmatpush1.msra.mxu0 0.0
    %1312 = vmatprep.subr.mxu0 0.0
    %1313 = vmatpush1.msra.mxu0 0.0
    %1314 = vmatprep.subr.mxu0 0.0
    %1315 = vmatpush1.msra.mxu0 0.0
    %1316 = vmatprep.subr.mxu0 0.0
    %1317 = vmatpush1.msra.mxu0 0.0
    %1318 = vmatprep.subr.mxu0 0.0
    %1319 = vmatpush1.msra.mxu0 0.0
    %1320 = vmatprep.subr.mxu0 0.0
    %1321 = vmatpush1.msra.mxu0 0.0
    %1322 = vmatprep.subr.mxu0 0.0
    %1323 = vmatpush1.msra.mxu0 0.0
    %1324 = vmatprep.subr.mxu0 0.0
    %1325 = vmatpush1.msra.mxu0 0.0
    %1326 = vmatprep.subr.mxu0 0.0
    %1327 = vmatpush1.msra.mxu0 0.0
    %1328 = vmatprep.subr.mxu0 0.0
    %1329 = vmatpush1.msra.mxu0 0.0
    %1330 = vmatprep.subr.mxu0 0.0
    %1331 = vmatpush1.msra.mxu0 0.0
    %1332 = vmatprep.subr.mxu0 0.0
    %1333 = vmatpush1.msra.mxu0 0.0
    %1334 = vmatprep.subr.mxu0 0.0
    %1335 = vmatpush1.msra.mxu0 0.0
    %1336 = vmatprep.subr.mxu0 0.0
    %1337 = vmatpush1.msra.mxu0 0.0
    %1338 = vmatprep.subr.mxu0 0.0
    %1339 = vmatpush1.msra.mxu0 0.0
    %1340 = vmatprep.subr.mxu0 0.0
    %1341 = vmatpush1.msra.mxu0 0.0
    %1342 = vmatprep.subr.mxu0 0.0
    %1343 = vmatpush1.msra.mxu0 0.0
    %1344 = vmatprep.subr.mxu0 0.0
    %1345 = vmatpush1.msra.mxu0 0.0
    %1346 = vmatprep.subr.mxu0 0.0
    %1347 = vmatpush1.msra.mxu0 0.0
    %1348 = vmatprep.subr.mxu0 0.0
    %1349 = vmatpush1.msra.mxu0 0.0
    %1350 = vmatprep.subr.mxu0 0.0
    %1351 = vmatpush1.msra.mxu0 0.0
    %1352 = vmatprep.subr.mxu0 0.0
    %1353 = vmatpush1.msra.mxu0 0.0
    %1354 = vmatprep.subr.mxu0 0.0
    %1355 = vmatpush1.msra.mxu0 0.0
    %1356 = vmatprep.subr.mxu0 0.0
    %1357 = vmatpush1.msra.mxu0 0.0
    %1358 = vmatprep.mubr.f32.mxu0 0.0
    %1359 = vmatmul.mubr.f32.gmra.mrb[0].mxu0 %v53
    %v1360 = vpop.f32.mrb[0].mxu0
    %v1361 = vadd.f32 0.0, %v1360
    %v1362 = vpop.f32.mrb[0].mxu0
    %1363 = vmatprep.mubr.f32.mxu0 0.0
    %1364 = vmatmul.mubr.f32.gmra.mrb[0].mxu0 %v56
    %v1365 = vpop.f32.mrb[0].mxu0
    %v1366 = vadd.f32 0.0, %v1365
    %v1367 = vpop.f32.mrb[0].mxu0
    %1368 = vmatprep.mubr.f32.mxu0 0.0
    %1369 = vmatmul.mubr.f32.gmra.mrb[0].mxu0 %v59
    %v1370 = vpop.f32.mrb[0].mxu0
    %v1371 = vadd.f32 0.0, %v1370
    %v1372 = vpop.f32.mrb[0].mxu0
    %1373 = vmatprep.mubr.f32.mxu0 0.0
    %1374 = vmatmul.mubr.f32.gmra.mrb[0].mxu0 %v62
    %v1375 = vpop.f32.mrb[0].mxu0
    %v1376 = vadd.f32 0.0, %v1375
    %v1377 = vpop.f32.mrb[0].mxu0
    %1378 = vdwg.mxu0
    %1379 = vmatprep.subr.mxu0 0.0
    %1380 = vmatpush1.msra.mxu0 %v1361
    %1381 = vmatprep.subr.mxu0 0.0
    %1382 = vmatpush1.msra.mxu0 %v1366
    %1383 = vmatprep.subr.mxu0 0.0
    %1384 = vmatpush1.msra.mxu0 %v1371
    %1385 = vmatprep.subr.mxu0 0.0
    %1386 = vmatpush1.msra.mxu0 %v1376
    %1387 = vmatprep.subr.mxu0 0.0
    %1388 = vmatpush1.msra.mxu0 0.0
    %1389 = vmatprep.subr.mxu0 0.0
    %1390 = vmatpush1.msra.mxu0 0.0
    %1391 = vmatprep.subr.mxu0 0.0
    %1392 = vmatpush1.msra.mxu0 0.0
    %1393 = vmatprep.subr.mxu0 0.0
    %1394 = vmatpush1.msra.mxu0 0.0
    %1395 = vmatprep.subr.mxu0 0.0
    %1396 = vmatpush1.msra.mxu0 0.0
    %1397 = vmatprep.subr.mxu0 0.0
    %1398 = vmatpush1.msra.mxu0 0.0
    %1399 = vmatprep.subr.mxu0 0.0
    %1400 = vmatpush1.msra.mxu0 0.0
    %1401 = vmatprep.subr.mxu0 0.0
    %1402 = vmatpush1.msra.mxu0 0.0
    %1403 = vmatprep.subr.mxu0 0.0
    %1404 = vmatpush1.msra.mxu0 0.0
    %1405 = vmatprep.subr.mxu0 0.0
    %1406 = vmatpush1.msra.mxu0 0.0
    %1407 = vmatprep.subr.mxu0 0.0
    %1408 = vmatpush1.msra.mxu0 0.0
    %1409 = vmatprep.subr.mxu0 0.0
    %1410 = vmatpush1.msra.mxu0 0.0
    %1411 = vmatprep.subr.mxu0 0.0
    %1412 = vmatpush1.msra.mxu0 0.0
    %1413 = vmatprep.subr.mxu0 0.0
    %1414 = vmatpush1.msra.mxu0 0.0
    %1415 = vmatprep.subr.mxu0 0.0
    %1416 = vmatpush1.msra.mxu0 0.0
    %1417 = vmatprep.subr.mxu0 0.0
    %1418 = vmatpush1.msra.mxu0 0.0
    %1419 = vmatprep.subr.mxu0 0.0
    %1420 = vmatpush1.msra.mxu0 0.0
    %1421 = vmatprep.subr.mxu0 0.0
    %1422 = vmatpush1.msra.mxu0 0.0
    %1423 = vmatprep.subr.mxu0 0.0
    %1424 = vmatpush1.msra.mxu0 0.0
    %1425 = vmatprep.subr.mxu0 0.0
    %1426 = vmatpush1.msra.mxu0 0.0
    %1427 = vmatprep.subr.mxu0 0.0
    %1428 = vmatpush1.msra.mxu0 0.0
    %1429 = vmatprep.subr.mxu0 0.0
    %1430 = vmatpush1.msra.mxu0 0.0
    %1431 = vmatprep.subr.mxu0 0.0
    %1432 = vmatpush1.msra.mxu0 0.0
    %1433 = vmatprep.subr.mxu0 0.0
    %1434 = vmatpush1.msra.mxu0 0.0
    %1435 = vmatprep.subr.mxu0 0.0
    %1436 = vmatpush1.msra.mxu0 0.0
    %1437 = vmatprep.subr.mxu0 0.0
    %1438 = vmatpush1.msra.mxu0 0.0
    %1439 = vmatprep.subr.mxu0 0.0
    %1440 = vmatpush1.msra.mxu0 0.0
    %1441 = vmatprep.subr.mxu0 0.0
    %1442 = vmatpush1.msra.mxu0 0.0
    %1443 = vmatprep.mubr.f32.mxu0 0.0
    %1444 = vmatmul.mubr.f32.gmra.mrb[0].mxu0 %v53
    %v1445 = vpop.f32.mrb[0].mxu0
    %v1446 = vadd.f32 0.0, %v1445
    %v1447 = vpop.f32.mrb[0].mxu0
    %1448 = vmatprep.mubr.f32.mxu0 0.0
    %1449 = vmatmul.mubr.f32.gmra.mrb[0].mxu0 %v56
    %v1450 = vpop.f32.mrb[0].mxu0
    %v1451 = vadd.f32 0.0, %v1450
    %v1452 = vpop.f32.mrb[0].mxu0
    %1453 = vmatprep.mubr.f32.mxu0 0.0
    %1454 = vmatmul.mubr.f32.gmra.mrb[0].mxu0 %v59
    %v1455 = vpop.f32.mrb[0].mxu0
    %v1456 = vadd.f32 0.0, %v1455
    %v1457 = vpop.f32.mrb[0].mxu0
    %1458 = vmatprep.mubr.f32.mxu0 0.0
    %1459 = vmatmul.mubr.f32.gmra.mrb[0].mxu0 %v62
    %v1460 = vpop.f32.mrb[0].mxu0
    %v1461 = vadd.f32 0.0, %v1460
    %v1462 = vpop.f32.mrb[0].mxu0
    %1463 = vdwg.mxu0
    %v1464 = vmul.f32 %v1446, 2.0
    %v1465 = vmul.f32 %v1451, 2.0
    %v1466 = vmul.f32 %v1456, 2.0
    %v1467 = vmul.f32 %v1461, 2.0
    %v1468 = vsub.f32 %v1464, %v1112
    %v1469 = vsub.f32 %v1465, %v1113
    %v1470 = vsub.f32 %v1466, %v1114
    %v1471 = vsub.f32 %v1467, %v1115
    %1476 = vrot.lane.b32.xlu0 %v1112, 32
    %v1477 = vpop.permute.xlu0 %1476
    %1478 = vrot.lane.b32.xlu0 %v1113, 32
    %v1479 = vpop.permute.xlu0 %1478
    %1480 = vrot.lane.b32.xlu0 %v1114, 32
    %v1481 = vpop.permute.xlu0 %1480
    %1482 = vrot.lane.b32.xlu0 %v1115, 32
    %v1483 = vpop.permute.xlu0 %1482
    %1492 = vrot.lane.b32.xlu0 %v1183, 64
    %v1493 = vpop.permute.xlu0 %1492
    %1494 = vrot.lane.b32.xlu0 %v1188, 64
    %v1495 = vpop.permute.xlu0 %1494
    %1496 = vrot.lane.b32.xlu0 %v1193, 64
    %v1497 = vpop.permute.xlu0 %1496
    %1498 = vrot.lane.b32.xlu0 %v1198, 64
    %v1499 = vpop.permute.xlu0 %1498
    %1508 = vrot.lane.b32.xlu0 %v1361, 96
    %v1509 = vpop.permute.xlu0 %1508
    %1510 = vrot.lane.b32.xlu0 %v1366, 96
    %v1511 = vpop.permute.xlu0 %1510
    %1512 = vrot.lane.b32.xlu0 %v1371, 96
    %v1513 = vpop.permute.xlu0 %1512
    %1514 = vrot.lane.b32.xlu0 %v1376, 96
    %v1515 = vpop.permute.xlu0 %1514
    %1524 = vrot.lane.b32.xlu0 %v1468, 32
    %v1525 = vpop.permute.xlu0 %1524
    %1526 = vrot.lane.b32.xlu0 %v1469, 32
    %v1527 = vpop.permute.xlu0 %1526
    %1528 = vrot.lane.b32.xlu0 %v1470, 32
    %v1529 = vpop.permute.xlu0 %1528
    %1530 = vrot.lane.b32.xlu0 %v1471, 32
    %v1531 = vpop.permute.xlu0 %1530
    %v1536 = vsel %vm51, %v1096, %v1477
    %v1537 = vsel %vm51, %v1098, %v1479
    %v1538 = vsel %vm51, %v1100, %v1481
    %v1539 = vsel %vm51, %v1102, %v1483
    %vm1540 = vcmask 523264
    %v1541 = vsel %vm1540, %v1536, %v1493
    %v1542 = vsel %vm1540, %v1537, %v1495
    %v1543 = vsel %vm1540, %v1538, %v1497
    %v1544 = vsel %vm1540, %v1539, %v1499
    %vm1545 = vcmask 785408
    %v1546 = vsel %vm1545, %v1541, %v1509
    %v1547 = vsel %vm1545, %v1542, %v1511
    %v1548 = vsel %vm1545, %v1543, %v1513
    %v1549 = vsel %vm1545, %v1544, %v1515
    %v1550 = vsel %vm51, %v1290, %v1525
    %v1551 = vsel %vm51, %v1291, %v1527
    %v1552 = vsel %vm51, %v1292, %v1529
    %v1553 = vsel %vm51, %v1293, %v1531
    %v1554 = vld [vmem:[%s7] sm:$0xff]
    %v1555 = vld [vmem:[%s7 + $0x8] sm:$0xff]
    %v1556 = vld [vmem:[%s7 + $0x10] sm:$0xff]
    %v1557 = vld [vmem:[%s7 + $0x18] sm:$0xff]
    %v1558 = vld [vmem:[%s7 + $0x20] sm:$0xff]
    %v1559 = vld [vmem:[%s7 + $0x28] sm:$0xff]
    %v1560 = vld [vmem:[%s7 + $0x30] sm:$0xff]
    %v1561 = vld [vmem:[%s7 + $0x38] sm:$0xff]
    %v1562 = vld [vmem:[%s7 + $0x40] sm:$0xff]
    %v1563 = vld [vmem:[%s7 + $0x48] sm:$0xff]
    %v1564 = vld [vmem:[%s7 + $0x50] sm:$0xff]
    %v1565 = vld [vmem:[%s7 + $0x58] sm:$0xff]
    %v1566 = vld [vmem:[%s7 + $0x60] sm:$0xff]
    %v1567 = vld [vmem:[%s7 + $0x68] sm:$0xff]
    %v1568 = vld [vmem:[%s7 + $0x70] sm:$0xff]
    %v1569 = vld [vmem:[%s7 + $0x78] sm:$0xff]
    %v1570 = vld [vmem:[%s7 + $0x80] sm:$0xff]
    %v1571 = vld [vmem:[%s7 + $0x88] sm:$0xff]
    %v1572 = vld [vmem:[%s7 + $0x90] sm:$0xff]
    %v1573 = vld [vmem:[%s7 + $0x98] sm:$0xff]
    %v1574 = vld [vmem:[%s7 + $0xa0] sm:$0xff]
    %v1575 = vld [vmem:[%s7 + $0xa8] sm:$0xff]
    %v1576 = vld [vmem:[%s7 + $0xb0] sm:$0xff]
    %v1577 = vld [vmem:[%s7 + $0xb8] sm:$0xff]
    %v1578 = vld [vmem:[%s8] sm:$0x1]
    %v1580 = vlaneseq
    %v1581 = vshrl.u32 %v1580, 7
    %v1582 = vsub.s32 0, %v1581
    %v1583 = vrot.slane %v1578, %v1582
    %v1586 = vsel %vm1540, %v1550, 0
    %v1589 = vsel %vm1540, %v1551, 0
    %v1592 = vsel %vm1540, %v1552, 0
    %v1595 = vsel %vm1540, %v1553, 0
    %1597 = vmatprep.subr.mxu0 0.0
    %1598 = vmatpush1.msra.mxu0 %v1554
    %1599 = vmatprep.subr.mxu0 0.0
    %1600 = vmatpush1.msra.mxu0 %v1555
    %1601 = vmatprep.subr.mxu0 0.0
    %1602 = vmatpush1.msra.mxu0 %v1556
    %1603 = vmatprep.subr.mxu0 0.0
    %1604 = vmatpush1.msra.mxu0 %v1557
    %1605 = vmatprep.subr.mxu0 0.0
    %1606 = vmatpush1.msra.mxu0 %v1558
    %1607 = vmatprep.subr.mxu0 0.0
    %1608 = vmatpush1.msra.mxu0 %v1559
    %1609 = vmatprep.subr.mxu0 0.0
    %1610 = vmatpush1.msra.mxu0 %v1560
    %1611 = vmatprep.subr.mxu0 0.0
    %1612 = vmatpush1.msra.mxu0 %v1561
    %1613 = vmatprep.subr.mxu0 0.0
    %1614 = vmatpush1.msra.mxu0 %v1562
    %1615 = vmatprep.subr.mxu0 0.0
    %1616 = vmatpush1.msra.mxu0 %v1563
    %1617 = vmatprep.subr.mxu0 0.0
    %1618 = vmatpush1.msra.mxu0 %v1564
    %1619 = vmatprep.subr.mxu0 0.0
    %1620 = vmatpush1.msra.mxu0 %v1565
    %1621 = vmatprep.subr.mxu0 0.0
    %1622 = vmatpush1.msra.mxu0 %v1566
    %1623 = vmatprep.subr.mxu0 0.0
    %1624 = vmatpush1.msra.mxu0 %v1567
    %1625 = vmatprep.subr.mxu0 0.0
    %1626 = vmatpush1.msra.mxu0 %v1568
    %1627 = vmatprep.subr.mxu0 0.0
    %1628 = vmatpush1.msra.mxu0 %v1569
    %1629 = vmatprep.subr.mxu0 0.0
    %1630 = vmatpush1.msra.mxu0 %v1570
    %1631 = vmatprep.subr.mxu0 0.0
    %1632 = vmatpush1.msra.mxu0 %v1571
    %1633 = vmatprep.subr.mxu0 0.0
    %1634 = vmatpush1.msra.mxu0 %v1572
    %1635 = vmatprep.subr.mxu0 0.0
    %1636 = vmatpush1.msra.mxu0 %v1573
    %1637 = vmatprep.subr.mxu0 0.0
    %1638 = vmatpush1.msra.mxu0 %v1574
    %1639 = vmatprep.subr.mxu0 0.0
    %1640 = vmatpush1.msra.mxu0 %v1575
    %1641 = vmatprep.subr.mxu0 0.0
    %1642 = vmatpush1.msra.mxu0 %v1576
    %1643 = vmatprep.subr.mxu0 0.0
    %1644 = vmatpush1.msra.mxu0 %v1577
    %1645 = vmatprep.subr.mxu0 0.0
    %1646 = vmatpush1.msra.mxu0 0.0
    %1647 = vmatprep.subr.mxu0 0.0
    %1648 = vmatpush1.msra.mxu0 0.0
    %1649 = vmatprep.subr.mxu0 0.0
    %1650 = vmatpush1.msra.mxu0 0.0
    %1651 = vmatprep.subr.mxu0 0.0
    %1652 = vmatpush1.msra.mxu0 0.0
    %1653 = vmatprep.subr.mxu0 0.0
    %1654 = vmatpush1.msra.mxu0 0.0
    %1655 = vmatprep.subr.mxu0 0.0
    %1656 = vmatpush1.msra.mxu0 0.0
    %1657 = vmatprep.subr.mxu0 0.0
    %1658 = vmatpush1.msra.mxu0 0.0
    %1659 = vmatprep.subr.mxu0 0.0
    %1660 = vmatpush1.msra.mxu0 0.0
    %1661 = vmatprep.mubr.f32.mxu0 %v1586
    %1662 = vmatmul.mubr.f32.gmra.mrb[0].mxu0 %v1546
    %v1663 = vpop.f32.mrb[0].mxu0
    %v1664 = vadd.f32 %v1583, %v1663
    %v1665 = vpop.f32.mrb[0].mxu0
    %1666 = vmatprep.mubr.f32.mxu0 %v1589
    %1667 = vmatmul.mubr.f32.gmra.mrb[0].mxu0 %v1547
    %v1668 = vpop.f32.mrb[0].mxu0
    %v1669 = vadd.f32 %v1583, %v1668
    %v1670 = vpop.f32.mrb[0].mxu0
    %1671 = vmatprep.mubr.f32.mxu0 %v1592
    %1672 = vmatmul.mubr.f32.gmra.mrb[0].mxu0 %v1548
    %v1673 = vpop.f32.mrb[0].mxu0
    %v1674 = vadd.f32 %v1583, %v1673
    %v1675 = vpop.f32.mrb[0].mxu0
    %1676 = vmatprep.mubr.f32.mxu0 %v1595
    %1677 = vmatmul.mubr.f32.gmra.mrb[0].mxu0 %v1549
    %v1678 = vpop.f32.mrb[0].mxu0
    %v1679 = vadd.f32 %v1583, %v1678
    %v1680 = vpop.f32.mrb[0].mxu0
    %1681 = vdwg.mxu0
    %v1682 = vxor.u32 %v1664, 2147483648
    %v1683 = vxor.u32 %v1669, 2147483648
    %v1684 = vxor.u32 %v1674, 2147483648
    %v1685 = vxor.u32 %v1679, 2147483648
    %v1686 = vmul.f32 %v1682, 1.442695
    %v1687 = vpow.pop %v1686
    %v1688 = vmul.f32 %v1683, 1.442695
    %v1689 = vpow.pop %v1688
    %v1690 = vmul.f32 %v1684, 1.442695
    %v1691 = vpow.pop %v1690
    %v1692 = vmul.f32 %v1685, 1.442695
    %v1693 = vpow.pop %v1692
    %v1694 = vadd.f32 %v1687, 1.0
    %v1695 = vadd.f32 %v1689, 1.0
    %v1696 = vadd.f32 %v1691, 1.0
    %v1697 = vadd.f32 %v1693, 1.0
    %v1698 = vrcp.pop %v1694
    %v1699 = vmul.f32 1.0, %v1698
    %v1700 = vrcp.pop %v1695
    %v1701 = vmul.f32 1.0, %v1700
    %v1702 = vrcp.pop %v1696
    %v1703 = vmul.f32 1.0, %v1702
    %v1704 = vrcp.pop %v1697
    %v1705 = vmul.f32 1.0, %v1704
    %v1706 = vmul.f32 %v1699, %v1112
    %v1707 = vmul.f32 %v1701, %v1113
    %v1708 = vmul.f32 %v1703, %v1114
    %v1709 = vmul.f32 %v1705, %v1115
    %1710 = vmatprep.subr.mxu0 0.0
    %1711 = vmatpush1.msra.mxu0 %v1706
    %1712 = vmatprep.subr.mxu0 0.0
    %1713 = vmatpush1.msra.mxu0 %v1707
    %1714 = vmatprep.subr.mxu0 0.0
    %1715 = vmatpush1.msra.mxu0 %v1708
    %1716 = vmatprep.subr.mxu0 0.0
    %1717 = vmatpush1.msra.mxu0 %v1709
    %1718 = vmatprep.subr.mxu0 0.0
    %1719 = vmatpush1.msra.mxu0 0.0
    %1720 = vmatprep.subr.mxu0 0.0
    %1721 = vmatpush1.msra.mxu0 0.0
    %1722 = vmatprep.subr.mxu0 0.0
    %1723 = vmatpush1.msra.mxu0 0.0
    %1724 = vmatprep.subr.mxu0 0.0
    %1725 = vmatpush1.msra.mxu0 0.0
    %1726 = vmatprep.subr.mxu0 0.0
    %1727 = vmatpush1.msra.mxu0 0.0
    %1728 = vmatprep.subr.mxu0 0.0
    %1729 = vmatpush1.msra.mxu0 0.0
    %1730 = vmatprep.subr.mxu0 0.0
    %1731 = vmatpush1.msra.mxu0 0.0
    %1732 = vmatprep.subr.mxu0 0.0
    %1733 = vmatpush1.msra.mxu0 0.0
    %1734 = vmatprep.subr.mxu0 0.0
    %1735 = vmatpush1.msra.mxu0 0.0
    %1736 = vmatprep.subr.mxu0 0.0
    %1737 = vmatpush1.msra.mxu0 0.0
    %1738 = vmatprep.subr.mxu0 0.0
    %1739 = vmatpush1.msra.mxu0 0.0
    %1740 = vmatprep.subr.mxu0 0.0
    %1741 = vmatpush1.msra.mxu0 0.0
    %1742 = vmatprep.subr.mxu0 0.0
    %1743 = vmatpush1.msra.mxu0 0.0
    %1744 = vmatprep.subr.mxu0 0.0
    %1745 = vmatpush1.msra.mxu0 0.0
    %1746 = vmatprep.subr.mxu0 0.0
    %1747 = vmatpush1.msra.mxu0 0.0
    %1748 = vmatprep.subr.mxu0 0.0
    %1749 = vmatpush1.msra.mxu0 0.0
    %1750 = vmatprep.subr.mxu0 0.0
    %1751 = vmatpush1.msra.mxu0 0.0
    %1752 = vmatprep.subr.mxu0 0.0
    %1753 = vmatpush1.msra.mxu0 0.0
    %1754 = vmatprep.subr.mxu0 0.0
    %1755 = vmatpush1.msra.mxu0 0.0
    %1756 = vmatprep.subr.mxu0 0.0
    %1757 = vmatpush1.msra.mxu0 0.0
    %1758 = vmatprep.subr.mxu0 0.0
    %1759 = vmatpush1.msra.mxu0 0.0
    %1760 = vmatprep.subr.mxu0 0.0
    %1761 = vmatpush1.msra.mxu0 0.0
    %1762 = vmatprep.subr.mxu0 0.0
    %1763 = vmatpush1.msra.mxu0 0.0
    %1764 = vmatprep.subr.mxu0 0.0
    %1765 = vmatpush1.msra.mxu0 0.0
    %1766 = vmatprep.subr.mxu0 0.0
    %1767 = vmatpush1.msra.mxu0 0.0
    %1768 = vmatprep.subr.mxu0 0.0
    %1769 = vmatpush1.msra.mxu0 0.0
    %1770 = vmatprep.subr.mxu0 0.0
    %1771 = vmatpush1.msra.mxu0 0.0
    %1772 = vmatprep.subr.mxu0 0.0
    %1773 = vmatpush1.msra.mxu0 0.0
    %1774 = vmatprep.mubr.f32.mxu0 0.0
    %1775 = vmatmul.mubr.f32.gmra.mrb[0].mxu0 %v53
    %v1776 = vpop.f32.mrb[0].mxu0
    %v1777 = vadd.f32 0.0, %v1776
    %v1778 = vpop.f32.mrb[0].mxu0
    %1779 = vmatprep.mubr.f32.mxu0 0.0
    %1780 = vmatmul.mubr.f32.gmra.mrb[0].mxu0 %v56
    %v1781 = vpop.f32.mrb[0].mxu0
    %v1782 = vadd.f32 0.0, %v1781
    %v1783 = vpop.f32.mrb[0].mxu0
    %1784 = vmatprep.mubr.f32.mxu0 0.0
    %1785 = vmatmul.mubr.f32.gmra.mrb[0].mxu0 %v59
    %v1786 = vpop.f32.mrb[0].mxu0
    %v1787 = vadd.f32 0.0, %v1786
    %v1788 = vpop.f32.mrb[0].mxu0
    %1789 = vmatprep.mubr.f32.mxu0 0.0
    %1790 = vmatmul.mubr.f32.gmra.mrb[0].mxu0 %v62
    %v1791 = vpop.f32.mrb[0].mxu0
    %v1792 = vadd.f32 0.0, %v1791
    %v1793 = vpop.f32.mrb[0].mxu0
    %1794 = vdwg.mxu0
    %1795 = vmatprep.subr.mxu0 0.0
    %1796 = vmatpush1.msra.mxu0 %v1777
    %1797 = vmatprep.subr.mxu0 0.0
    %1798 = vmatpush1.msra.mxu0 %v1782
    %1799 = vmatprep.subr.mxu0 0.0
    %1800 = vmatpush1.msra.mxu0 %v1787
    %1801 = vmatprep.subr.mxu0 0.0
    %1802 = vmatpush1.msra.mxu0 %v1792
    %1803 = vmatprep.subr.mxu0 0.0
    %1804 = vmatpush1.msra.mxu0 0.0
    %1805 = vmatprep.subr.mxu0 0.0
    %1806 = vmatpush1.msra.mxu0 0.0
    %1807 = vmatprep.subr.mxu0 0.0
    %1808 = vmatpush1.msra.mxu0 0.0
    %1809 = vmatprep.subr.mxu0 0.0
    %1810 = vmatpush1.msra.mxu0 0.0
    %1811 = vmatprep.subr.mxu0 0.0
    %1812 = vmatpush1.msra.mxu0 0.0
    %1813 = vmatprep.subr.mxu0 0.0
    %1814 = vmatpush1.msra.mxu0 0.0
    %1815 = vmatprep.subr.mxu0 0.0
    %1816 = vmatpush1.msra.mxu0 0.0
    %1817 = vmatprep.subr.mxu0 0.0
    %1818 = vmatpush1.msra.mxu0 0.0
    %1819 = vmatprep.subr.mxu0 0.0
    %1820 = vmatpush1.msra.mxu0 0.0
    %1821 = vmatprep.subr.mxu0 0.0
    %1822 = vmatpush1.msra.mxu0 0.0
    %1823 = vmatprep.subr.mxu0 0.0
    %1824 = vmatpush1.msra.mxu0 0.0
    %1825 = vmatprep.subr.mxu0 0.0
    %1826 = vmatpush1.msra.mxu0 0.0
    %1827 = vmatprep.subr.mxu0 0.0
    %1828 = vmatpush1.msra.mxu0 0.0
    %1829 = vmatprep.subr.mxu0 0.0
    %1830 = vmatpush1.msra.mxu0 0.0
    %1831 = vmatprep.subr.mxu0 0.0
    %1832 = vmatpush1.msra.mxu0 0.0
    %1833 = vmatprep.subr.mxu0 0.0
    %1834 = vmatpush1.msra.mxu0 0.0
    %1835 = vmatprep.subr.mxu0 0.0
    %1836 = vmatpush1.msra.mxu0 0.0
    %1837 = vmatprep.subr.mxu0 0.0
    %1838 = vmatpush1.msra.mxu0 0.0
    %1839 = vmatprep.subr.mxu0 0.0
    %1840 = vmatpush1.msra.mxu0 0.0
    %1841 = vmatprep.subr.mxu0 0.0
    %1842 = vmatpush1.msra.mxu0 0.0
    %1843 = vmatprep.subr.mxu0 0.0
    %1844 = vmatpush1.msra.mxu0 0.0
    %1845 = vmatprep.subr.mxu0 0.0
    %1846 = vmatpush1.msra.mxu0 0.0
    %1847 = vmatprep.subr.mxu0 0.0
    %1848 = vmatpush1.msra.mxu0 0.0
    %1849 = vmatprep.subr.mxu0 0.0
    %1850 = vmatpush1.msra.mxu0 0.0
    %1851 = vmatprep.subr.mxu0 0.0
    %1852 = vmatpush1.msra.mxu0 0.0
    %1853 = vmatprep.subr.mxu0 0.0
    %1854 = vmatpush1.msra.mxu0 0.0
    %1855 = vmatprep.subr.mxu0 0.0
    %1856 = vmatpush1.msra.mxu0 0.0
    %1857 = vmatprep.subr.mxu0 0.0
    %1858 = vmatpush1.msra.mxu0 0.0
    %1859 = vmatprep.mubr.f32.mxu0 0.0
    %1860 = vmatmul.mubr.f32.gmra.mrb[0].mxu0 %v53
    %v1861 = vpop.f32.mrb[0].mxu0
    %v1862 = vadd.f32 0.0, %v1861
    %v1863 = vpop.f32.mrb[0].mxu0
    %1864 = vmatprep.mubr.f32.mxu0 0.0
    %1865 = vmatmul.mubr.f32.gmra.mrb[0].mxu0 %v56
    %v1866 = vpop.f32.mrb[0].mxu0
    %v1867 = vadd.f32 0.0, %v1866
    %v1868 = vpop.f32.mrb[0].mxu0
    %1869 = vmatprep.mubr.f32.mxu0 0.0
    %1870 = vmatmul.mubr.f32.gmra.mrb[0].mxu0 %v59
    %v1871 = vpop.f32.mrb[0].mxu0
    %v1872 = vadd.f32 0.0, %v1871
    %v1873 = vpop.f32.mrb[0].mxu0
    %1874 = vmatprep.mubr.f32.mxu0 0.0
    %1875 = vmatmul.mubr.f32.gmra.mrb[0].mxu0 %v62
    %v1876 = vpop.f32.mrb[0].mxu0
    %v1877 = vadd.f32 0.0, %v1876
    %v1878 = vpop.f32.mrb[0].mxu0
    %1879 = vdwg.mxu0
    %v1880 = vmul.f32 %v1862, 2.0
    %v1881 = vmul.f32 %v1867, 2.0
    %v1882 = vmul.f32 %v1872, 2.0
    %v1883 = vmul.f32 %v1877, 2.0
    %v1884 = vsub.f32 %v1880, %v1706
    %v1885 = vsub.f32 %v1881, %v1707
    %v1886 = vsub.f32 %v1882, %v1708
    %v1887 = vsub.f32 %v1883, %v1709
    %1892 = vrot.lane.b32.xlu0 %v1706, 32
    %v1893 = vpop.permute.xlu0 %1892
    %1894 = vrot.lane.b32.xlu0 %v1707, 32
    %v1895 = vpop.permute.xlu0 %1894
    %1896 = vrot.lane.b32.xlu0 %v1708, 32
    %v1897 = vpop.permute.xlu0 %1896
    %1898 = vrot.lane.b32.xlu0 %v1709, 32
    %v1899 = vpop.permute.xlu0 %1898
    %1908 = vrot.lane.b32.xlu0 %v1777, 96
    %v1909 = vpop.permute.xlu0 %1908
    %1910 = vrot.lane.b32.xlu0 %v1782, 96
    %v1911 = vpop.permute.xlu0 %1910
    %1912 = vrot.lane.b32.xlu0 %v1787, 96
    %v1913 = vpop.permute.xlu0 %1912
    %1914 = vrot.lane.b32.xlu0 %v1792, 96
    %v1915 = vpop.permute.xlu0 %1914
    %1924 = vrot.lane.b32.xlu0 %v1884, 32
    %v1925 = vpop.permute.xlu0 %1924
    %1926 = vrot.lane.b32.xlu0 %v1885, 32
    %v1927 = vpop.permute.xlu0 %1926
    %1928 = vrot.lane.b32.xlu0 %v1886, 32
    %v1929 = vpop.permute.xlu0 %1928
    %1930 = vrot.lane.b32.xlu0 %v1887, 32
    %v1931 = vpop.permute.xlu0 %1930
    %v1936 = vsel %vm51, %v1096, %v1893
    %v1937 = vsel %vm51, %v1098, %v1895
    %v1938 = vsel %vm51, %v1100, %v1897
    %v1939 = vsel %vm51, %v1102, %v1899
    %v1940 = vsel %vm1540, %v1936, %v1493
    %v1941 = vsel %vm1540, %v1937, %v1495
    %v1942 = vsel %vm1540, %v1938, %v1497
    %v1943 = vsel %vm1540, %v1939, %v1499
    %v1944 = vsel %vm1545, %v1940, %v1909
    %v1945 = vsel %vm1545, %v1941, %v1911
    %v1946 = vsel %vm1545, %v1942, %v1913
    %v1947 = vsel %vm1545, %v1943, %v1915
    %v1948 = vsel %vm51, %v1290, %v1925
    %v1949 = vsel %vm51, %v1291, %v1927
    %v1950 = vsel %vm51, %v1292, %v1929
    %v1951 = vsel %vm51, %v1293, %v1931
    %v1952 = vld [vmem:[%s9] sm:$0xff]
    %v1953 = vld [vmem:[%s9 + $0x8] sm:$0xff]
    %v1954 = vld [vmem:[%s9 + $0x10] sm:$0xff]
    %v1955 = vld [vmem:[%s9 + $0x18] sm:$0xff]
    %v1956 = vld [vmem:[%s9 + $0x20] sm:$0xff]
    %v1957 = vld [vmem:[%s9 + $0x28] sm:$0xff]
    %v1958 = vld [vmem:[%s9 + $0x30] sm:$0xff]
    %v1959 = vld [vmem:[%s9 + $0x38] sm:$0xff]
    %v1960 = vld [vmem:[%s9 + $0x40] sm:$0xff]
    %v1961 = vld [vmem:[%s9 + $0x48] sm:$0xff]
    %v1962 = vld [vmem:[%s9 + $0x50] sm:$0xff]
    %v1963 = vld [vmem:[%s9 + $0x58] sm:$0xff]
    %v1964 = vld [vmem:[%s9 + $0x60] sm:$0xff]
    %v1965 = vld [vmem:[%s9 + $0x68] sm:$0xff]
    %v1966 = vld [vmem:[%s9 + $0x70] sm:$0xff]
    %v1967 = vld [vmem:[%s9 + $0x78] sm:$0xff]
    %v1968 = vld [vmem:[%s9 + $0x80] sm:$0xff]
    %v1969 = vld [vmem:[%s9 + $0x88] sm:$0xff]
    %v1970 = vld [vmem:[%s9 + $0x90] sm:$0xff]
    %v1971 = vld [vmem:[%s9 + $0x98] sm:$0xff]
    %v1972 = vld [vmem:[%s9 + $0xa0] sm:$0xff]
    %v1973 = vld [vmem:[%s9 + $0xa8] sm:$0xff]
    %v1974 = vld [vmem:[%s9 + $0xb0] sm:$0xff]
    %v1975 = vld [vmem:[%s9 + $0xb8] sm:$0xff]
    %v1976 = vld [vmem:[%s10] sm:$0x1]
    %v1978 = vlaneseq
    %v1979 = vshrl.u32 %v1978, 7
    %v1980 = vsub.s32 0, %v1979
    %v1981 = vrot.slane %v1976, %v1980
    %v1984 = vsel %vm1540, %v1948, 0
    %v1987 = vsel %vm1540, %v1949, 0
    %v1990 = vsel %vm1540, %v1950, 0
    %v1993 = vsel %vm1540, %v1951, 0
    %1995 = vmatprep.subr.mxu0 0.0
    %1996 = vmatpush1.msra.mxu0 %v1952
    %1997 = vmatprep.subr.mxu0 0.0
    %1998 = vmatpush1.msra.mxu0 %v1953
    %1999 = vmatprep.subr.mxu0 0.0
    %2000 = vmatpush1.msra.mxu0 %v1954
    %2001 = vmatprep.subr.mxu0 0.0
    %2002 = vmatpush1.msra.mxu0 %v1955
    %2003 = vmatprep.subr.mxu0 0.0
    %2004 = vmatpush1.msra.mxu0 %v1956
    %2005 = vmatprep.subr.mxu0 0.0
    %2006 = vmatpush1.msra.mxu0 %v1957
    %2007 = vmatprep.subr.mxu0 0.0
    %2008 = vmatpush1.msra.mxu0 %v1958
    %2009 = vmatprep.subr.mxu0 0.0
    %2010 = vmatpush1.msra.mxu0 %v1959
    %2011 = vmatprep.subr.mxu0 0.0
    %2012 = vmatpush1.msra.mxu0 %v1960
    %2013 = vmatprep.subr.mxu0 0.0
    %2014 = vmatpush1.msra.mxu0 %v1961
    %2015 = vmatprep.subr.mxu0 0.0
    %2016 = vmatpush1.msra.mxu0 %v1962
    %2017 = vmatprep.subr.mxu0 0.0
    %2018 = vmatpush1.msra.mxu0 %v1963
    %2019 = vmatprep.subr.mxu0 0.0
    %2020 = vmatpush1.msra.mxu0 %v1964
    %2021 = vmatprep.subr.mxu0 0.0
    %2022 = vmatpush1.msra.mxu0 %v1965
    %2023 = vmatprep.subr.mxu0 0.0
    %2024 = vmatpush1.msra.mxu0 %v1966
    %2025 = vmatprep.subr.mxu0 0.0
    %2026 = vmatpush1.msra.mxu0 %v1967
    %2027 = vmatprep.subr.mxu0 0.0
    %2028 = vmatpush1.msra.mxu0 %v1968
    %2029 = vmatprep.subr.mxu0 0.0
    %2030 = vmatpush1.msra.mxu0 %v1969
    %2031 = vmatprep.subr.mxu0 0.0
    %2032 = vmatpush1.msra.mxu0 %v1970
    %2033 = vmatprep.subr.mxu0 0.0
    %2034 = vmatpush1.msra.mxu0 %v1971
    %2035 = vmatprep.subr.mxu0 0.0
    %2036 = vmatpush1.msra.mxu0 %v1972
    %2037 = vmatprep.subr.mxu0 0.0
    %2038 = vmatpush1.msra.mxu0 %v1973
    %2039 = vmatprep.subr.mxu0 0.0
    %2040 = vmatpush1.msra.mxu0 %v1974
    %2041 = vmatprep.subr.mxu0 0.0
    %2042 = vmatpush1.msra.mxu0 %v1975
    %2043 = vmatprep.subr.mxu0 0.0
    %2044 = vmatpush1.msra.mxu0 0.0
    %2045 = vmatprep.subr.mxu0 0.0
    %2046 = vmatpush1.msra.mxu0 0.0
    %2047 = vmatprep.subr.mxu0 0.0
    %2048 = vmatpush1.msra.mxu0 0.0
    %2049 = vmatprep.subr.mxu0 0.0
    %2050 = vmatpush1.msra.mxu0 0.0
    %2051 = vmatprep.subr.mxu0 0.0
    %2052 = vmatpush1.msra.mxu0 0.0
    %2053 = vmatprep.subr.mxu0 0.0
    %2054 = vmatpush1.msra.mxu0 0.0
    %2055 = vmatprep.subr.mxu0 0.0
    %2056 = vmatpush1.msra.mxu0 0.0
    %2057 = vmatprep.subr.mxu0 0.0
    %2058 = vmatpush1.msra.mxu0 0.0
    %2059 = vmatprep.mubr.f32.mxu0 %v1984
    %2060 = vmatmul.mubr.f32.gmra.mrb[0].mxu0 %v1944
    %v2061 = vpop.f32.mrb[0].mxu0
    %v2062 = vadd.f32 %v1981, %v2061
    %v2063 = vpop.f32.mrb[0].mxu0
    %2064 = vmatprep.mubr.f32.mxu0 %v1987
    %2065 = vmatmul.mubr.f32.gmra.mrb[0].mxu0 %v1945
    %v2066 = vpop.f32.mrb[0].mxu0
    %v2067 = vadd.f32 %v1981, %v2066
    %v2068 = vpop.f32.mrb[0].mxu0
    %2069 = vmatprep.mubr.f32.mxu0 %v1990
    %2070 = vmatmul.mubr.f32.gmra.mrb[0].mxu0 %v1946
    %v2071 = vpop.f32.mrb[0].mxu0
    %v2072 = vadd.f32 %v1981, %v2071
    %v2073 = vpop.f32.mrb[0].mxu0
    %2074 = vmatprep.mubr.f32.mxu0 %v1993
    %2075 = vmatmul.mubr.f32.gmra.mrb[0].mxu0 %v1947
    %v2076 = vpop.f32.mrb[0].mxu0
    %v2077 = vadd.f32 %v1981, %v2076
    %v2078 = vpop.f32.mrb[0].mxu0
    %2079 = vdwg.mxu0
    %v2080 = vtanh.pop %v2062
    %v2081 = vtanh.pop %v2067
    %v2082 = vtanh.pop %v2072
    %v2083 = vtanh.pop %v2077
    %v2084 = vmul.f32 %v1699, %v1477
    %v2085 = vmul.f32 %v1701, %v1479
    %v2086 = vmul.f32 %v1703, %v1481
    %v2087 = vmul.f32 %v1705, %v1483
    %v2088 = vsub.f32 1.0, %v1699
    %v2089 = vsub.f32 1.0, %v1701
    %v2090 = vsub.f32 1.0, %v1703
    %v2091 = vsub.f32 1.0, %v1705
    %2096 = vrot.lane.b32.xlu0 %v2080, 32
    %v2097 = vpop.permute.xlu0 %2096
    %2098 = vrot.lane.b32.xlu0 %v2081, 32
    %v2099 = vpop.permute.xlu0 %2098
    %2100 = vrot.lane.b32.xlu0 %v2082, 32
    %v2101 = vpop.permute.xlu0 %2100
    %2102 = vrot.lane.b32.xlu0 %v2083, 32
    %v2103 = vpop.permute.xlu0 %2102
    %v2108 = vmul.f32 %v2088, %v2097
    %v2109 = vmul.f32 %v2089, %v2099
    %v2110 = vmul.f32 %v2090, %v2101
    %v2111 = vmul.f32 %v2091, %v2103
    %v2112 = vadd.f32 %v2084, %v2108
    %v2113 = vadd.f32 %v2085, %v2109
    %v2114 = vadd.f32 %v2086, %v2110
    %v2115 = vadd.f32 %v2087, %v2111
    %2120 = vrot.lane.b32.xlu0 %v2112, 96
    %v2121 = vpop.permute.xlu0 %2120
    %2122 = vrot.lane.b32.xlu0 %v2113, 96
    %v2123 = vpop.permute.xlu0 %2122
    %2124 = vrot.lane.b32.xlu0 %v2114, 96
    %v2125 = vpop.permute.xlu0 %2124
    %2126 = vrot.lane.b32.xlu0 %v2115, 96
    %v2127 = vpop.permute.xlu0 %2126
    %s2132 = scalar_lea.vmem [#allocation2], 32
    %2133 = vst.msk [vmem:[%s2132] sm:$0xff] %vm51, %v2121
    %2134 = vst.msk [vmem:[%s2132 + $0x8] sm:$0xff] %vm51, %v2123
    %2135 = vst.msk [vmem:[%s2132 + $0x10] sm:$0xff] %vm51, %v2125
    %2136 = vst.msk [vmem:[%s2132 + $0x18] sm:$0xff] %vm51, %v2127
    // Predicated region
    $region46: #{tpu_custom_call.1} parent=1 // pred_check
      _
    $region47: #{tpu_custom_call.1} parent=1 // pred_check_branch
      %2138 = sbr.rel (0) target = $region49
    $region48: #{tpu_custom_call.1} parent=1 // pred_region
      %s2140 = ssub.s32 1024, 1024
      %2141 = vsyncadd [#allocation3], %s2140
      %s2142 = sshll.u32 [#allocation2], 4
      %s2143 = int_to_ptr.vmem [resolvable:$true] %s2142
      %2148 = dma.vmem_to_hbm [thread:$0]  %s2143, 1024, %s11, [#allocation3], 128, 128, 8
    $region49: #{tpu_custom_call.1} parent=1 // pred_fallthru
      _
    // Predicated region
    $region50: #{tpu_custom_call.1} parent=1 // pred_check
      _
    $region51: #{tpu_custom_call.1} parent=1 // pred_check_branch
      %2150 = sbr.rel (0) target = $region53
    $region52: #{tpu_custom_call.1} parent=1 // pred_region
      %2151 = dma.done [#allocation3], 1024
    $region53: #{tpu_custom_call.1} parent=1 // pred_fallthru
      _
    %2152 = vsyncpa [#allocation3], 1

</llo_original>
